<compile_context>
chip_gen: v6e
topology: v6e:2x2x1
jax: 0.10.0
libtpu: 0.0.40
codegen_flags: <defaults>
</compile_context>

<pallas_src>
import jax
import jax.numpy as jnp
from jax.experimental import pallas as pl
from jax.experimental.pallas import tpu as pltpu


_LANE = 128
_ROW_BYTES_TARGET = 4096          # aim for ~4 KiB per strided-DMA row
_MIN_TILE = 512                   # floor for the default tile edge (elements)
_XLA_FALLBACK_PLANE_BYTES = 256 << 10
_BATCH_BLOCK_BYTES_TARGET = 2 << 20
_MAX_BATCH_UNROLL = 32


def _vmem_capacity_bytes() -> int:
    """Per-TensorCore VMEM capacity; conservative (v7x) default if unknown."""
    try:
        info = pltpu.get_tpu_info()
        cap = getattr(info, "vmem_capacity_bytes", None)
        if cap:
            return int(cap)
    except Exception:
        pass
    return 64 << 20


def _round_block(requested: int, dim: int) -> int:
    """Clamp/round a block edge to a layout-legal value (full extent or k*128)."""
    b = min(int(requested), dim)
    if b >= dim:
        return dim
    return max(_LANE, (b // _LANE) * _LANE)


def _shrink_to_budget(ts, th, S, H, itemsize, budget):
    """Halve tile edges (lane-aligned) until double-buffered in+out fits budget."""
    def footprint(a, b):
        return 4 * a * b * itemsize  # 2 buffers each for the input and output tile
    while footprint(ts, th) > budget and max(ts, th) > _LANE:
        if ts >= th:
            ts = _round_block(max(_LANE, ts // 2), S)
        else:
            th = _round_block(max(_LANE, th // 2), H)
    return ts, th


def _tile_transpose_kernel(x_ref, o_ref):
    # x_ref: (ts, th) input tile; o_ref: (th, ts) output tile.  Cross-tile
    # placement is handled entirely by the output index_map; only the in-tile
    # 2-D (XLU) transpose happens here.
    o_ref[...] = x_ref[...].T


def _make_batched_kernel(bt: int):
    def kernel(x_ref, o_ref):
        # x_ref: (bt, S, H), o_ref: (bt, H, S).  Statically unrolled per-slice
        # 2-D transposes keep the lowering on the well-supported vxpose path.
        for b in range(bt):
            o_ref[b, :, :] = x_ref[b, :, :].T
    return kernel


def transpose_pallas(x: jax.Array, dim0: int, dim1: int,
                     block_s: int | None = None,
                     block_h: int | None = None) -> jax.Array:
    """Replicates Transpose(dim0, dim1).forward(x) for 3-D (B, S, H) inputs.

    Torch offsets the configured axes by +1 (batch dim excluded from the config),
    so the supported (dim0, dim1) pairs here are permutations of {0, 1}, i.e.
    axes {1, 2} of x.
    """
    a, b = sorted((dim0 + 1, dim1 + 1))
    if a == b:
        return x
    if x.ndim != 3 or (a, b) != (1, 2):
        # TODO(synk): general N-D axis permutations are not lowered to a kernel here.
        raise NotImplementedError(
            "kernel supports 3-D inputs with the two non-batch axes swapped")

    B, S, H = x.shape
    itemsize = jnp.dtype(x.dtype).itemsize
    plane_bytes = S * H * itemsize

    # Path 1: tiny / lane-starved shapes -> XLA fused transpose.  A Pallas kernel
    # here is dominated by launch + per-step overhead and masked partial stores.
    if max(S, H) < _LANE or (plane_bytes < _XLA_FALLBACK_PLANE_BYTES
                             and min(S, H) < _LANE):
        return jnp.swapaxes(x, 1, 2)

    capacity = _vmem_capacity_bytes()
    buffer_budget = (capacity * 3) // 4      # ~48 MiB v7x, ~96 MiB v5e/v6e
    cost = pl.CostEstimate(flops=0, transcendentals=0,
                           bytes_accessed=2 * B * S * H * itemsize)
    target = max(_MIN_TILE, _ROW_BYTES_TARGET // itemsize)

    # Path 2: small planes -> aggregate batches into one ~2 MiB block per step.
    if S <= target and H <= target and block_s is None and block_h is None:
        bt = max(1, min(B, _BATCH_BLOCK_BYTES_TARGET // max(plane_bytes, 1),
                        _MAX_BATCH_UNROLL))
        while B % bt:           # keep the batch grid axis exactly divisible
            bt -= 1
        vmem_needed = 4 * bt * plane_bytes
        vmem_limit = int(min(capacity - (4 << 20),
                             max(vmem_needed + (8 << 20), 32 << 20)))
        return pl.pallas_call(
            _make_batched_kernel(bt),
            out_shape=jax.ShapeDtypeStruct((B, H, S), x.dtype),
            grid_spec=pltpu.PrefetchScalarGridSpec(
                num_scalar_prefetch=0,
                grid=(B // bt,),
                in_specs=[pl.BlockSpec((bt, S, H), lambda i: (i, 0, 0))],
                out_specs=pl.BlockSpec((bt, H, S), lambda i: (i, 0, 0)),
            ),
            compiler_params=pltpu.CompilerParams(
                dimension_semantics=("parallel",),
                vmem_limit_bytes=vmem_limit,
            ),
            cost_estimate=cost,
        )(x)

    # Path 3: tiled path.  User blocks are rounded to legal sizes; tiles are
    # shrunk (never vmem_limit under-provisioned) to fit the per-chip budget.
    ts = _round_block(block_s, S) if block_s is not None else (S if S <= target else target)
    th = _round_block(block_h, H) if block_h is not None else (H if H <= target else target)
    ts, th = _shrink_to_budget(ts, th, S, H, itemsize, buffer_budget)
    vmem_needed = 4 * ts * th * itemsize
    vmem_limit = int(min(capacity - (4 << 20),
                         max(vmem_needed + (8 << 20), 32 << 20)))

    gs, gh = pl.cdiv(S, ts), pl.cdiv(H, th)
    # Largest grid axis first so v7x megacore splits it across both TensorCores.
    if gs >= gh:
        grid = (gs, gh, B)
        in_map = lambda i, j, bi: (bi, i, j)
        out_map = lambda i, j, bi: (bi, j, i)   # axis swap lives in the index_map
    else:
        grid = (gh, gs, B)
        in_map = lambda j, i, bi: (bi, i, j)
        out_map = lambda j, i, bi: (bi, j, i)

    return pl.pallas_call(
        _tile_transpose_kernel,
        out_shape=jax.ShapeDtypeStruct((B, H, S), x.dtype),
        grid_spec=pltpu.PrefetchScalarGridSpec(
            num_scalar_prefetch=0,
            grid=grid,
            in_specs=[pl.BlockSpec((pl.Squeezed(), ts, th), in_map)],
            out_specs=pl.BlockSpec((pl.Squeezed(), th, ts), out_map),
        ),
        compiler_params=pltpu.CompilerParams(
            dimension_semantics=("parallel", "parallel", "parallel"),
            vmem_limit_bytes=vmem_limit,
        ),
        cost_estimate=cost,
    )(x)


if __name__ == "__main__":
    key = jax.random.PRNGKey(0)
    k1, k2, k3, k4, k5 = jax.random.split(key, 5)

    # Case 1: module-typical tiny shape (lane-starved) -> XLA swapaxes fallback.
    x1 = jax.random.normal(k1, (2, 8, 32), dtype=jnp.float32)
    o1 = jax.block_until_ready(transpose_pallas(x1, dim0=0, dim1=1))
    assert o1.shape == (2, 32, 8) and o1.dtype == x1.dtype
    assert jnp.array_equal(o1, jnp.swapaxes(x1, 1, 2)), "mismatch (case 1, fallback)"

    # Case 2: batch-aggregated Pallas path (single grid step, lane-dense stores).
    x2 = jax.random.normal(k2, (4, 256, 384), dtype=jnp.float32)
    o2 = jax.block_until_ready(transpose_pallas(x2, dim0=1, dim1=0))
    assert jnp.array_equal(o2, jnp.swapaxes(x2, 1, 2)), "mismatch (case 2, batched)"

    # Case 3: batch-aggregated path with multiple grid steps (bt < B).
    x3 = jax.random.normal(k3, (6, 512, 512), dtype=jnp.float32)
    o3 = jax.block_until_ready(transpose_pallas(x3, dim0=0, dim1=1))
    assert jnp.array_equal(o3, jnp.swapaxes(x3, 1, 2)), "mismatch (case 3, batched grid)"

    # Case 4: tiled path via explicit block overrides (block_s=200 rounds to 128),
    # with ragged edge tiles on both S and H.
    x4 = jax.random.normal(k4, (2, 400, 384), dtype=jnp.float32)
    o4 = jax.block_until_ready(transpose_pallas(x4, dim0=0, dim1=1,
                                                block_s=200, block_h=256))
    assert jnp.array_equal(o4, jnp.swapaxes(x4, 1, 2)), "mismatch (case 4, tiled)"

    # Case 5: bf16 batched path (dtype-dependent sublane packing).
    x5 = jax.random.normal(k5, (4, 128, 256), dtype=jnp.bfloat16)
    o5 = jax.block_until_ready(transpose_pallas(x5, dim0=1, dim1=0))
    assert jnp.array_equal(o5, jnp.swapaxes(x5, 1, 2)), "mismatch (case 5, bf16)"

    print("KERNEL_OK")
</pallas_src>

<mosaic_0001>
module attributes {stable_mosaic.version = 11 : i64} {
  func.func @kernel(%arg0: i32, %arg1: memref<4x256x384xf32, #tpu.memory_space<vmem>>, %arg2: memref<4x384x256xf32, #tpu.memory_space<vmem>>) attributes {dimension_semantics = [#tpu.dimension_semantics<parallel>], iteration_bounds = array<i64: 1>, scalar_prefetch = 0 : i64, scratch_operands = 0 : i64, tpu.core_type = #tpu.core_type<tc>, window_params = [{transform_indices = @transform_0, window_bounds = array<i64: 4, 256, 384>}, {transform_indices = @transform_1, window_bounds = array<i64: 4, 384, 256>}]} {
    %c0 = arith.constant 0 : index
    %c0_0 = arith.constant 0 : index
    %c0_1 = arith.constant 0 : index
    %0 = vector.load %arg1[%c0, %c0_0, %c0_1] : memref<4x256x384xf32, #tpu.memory_space<vmem>>, vector<1x256x384xf32>
    %1 = vector.shape_cast %0 : vector<1x256x384xf32> to vector<256x384xf32>
    %2 = tpu.transpose %1, [1, 0] : vector<256x384xf32> -> vector<384x256xf32>
    %c0_2 = arith.constant 0 : index
    %c0_3 = arith.constant 0 : index
    %c0_4 = arith.constant 0 : index
    %3 = vector.load %arg2[%c0_2, %c0_3, %c0_4] : memref<4x384x256xf32, #tpu.memory_space<vmem>>, vector<1x384x256xf32>
    %4 = vector.shape_cast %3 : vector<1x384x256xf32> to vector<384x256xf32>
    %5 = vector.shape_cast %2 : vector<384x256xf32> to vector<1x384x256xf32>
    tpu.vector_store %arg2[%c0_2, %c0_3, %c0_4], %5 {strides = array<i32>} : memref<4x384x256xf32, #tpu.memory_space<vmem>>, vector<1x384x256xf32>,
    %c1 = arith.constant 1 : index
    %c0_5 = arith.constant 0 : index
    %c0_6 = arith.constant 0 : index
    %6 = vector.load %arg1[%c1, %c0_5, %c0_6] : memref<4x256x384xf32, #tpu.memory_space<vmem>>, vector<1x256x384xf32>
    %7 = vector.shape_cast %6 : vector<1x256x384xf32> to vector<256x384xf32>
    %8 = tpu.transpose %7, [1, 0] : vector<256x384xf32> -> vector<384x256xf32>
    %c1_7 = arith.constant 1 : index
    %c0_8 = arith.constant 0 : index
    %c0_9 = arith.constant 0 : index
    %9 = vector.load %arg2[%c1_7, %c0_8, %c0_9] : memref<4x384x256xf32, #tpu.memory_space<vmem>>, vector<1x384x256xf32>
    %10 = vector.shape_cast %9 : vector<1x384x256xf32> to vector<384x256xf32>
    %11 = vector.shape_cast %8 : vector<384x256xf32> to vector<1x384x256xf32>
    tpu.vector_store %arg2[%c1_7, %c0_8, %c0_9], %11 {strides = array<i32>} : memref<4x384x256xf32, #tpu.memory_space<vmem>>, vector<1x384x256xf32>,
    %c2 = arith.constant 2 : index
    %c0_10 = arith.constant 0 : index
    %c0_11 = arith.constant 0 : index
    %12 = vector.load %arg1[%c2, %c0_10, %c0_11] : memref<4x256x384xf32, #tpu.memory_space<vmem>>, vector<1x256x384xf32>
    %13 = vector.shape_cast %12 : vector<1x256x384xf32> to vector<256x384xf32>
    %14 = tpu.transpose %13, [1, 0] : vector<256x384xf32> -> vector<384x256xf32>
    %c2_12 = arith.constant 2 : index
    %c0_13 = arith.constant 0 : index
    %c0_14 = arith.constant 0 : index
    %15 = vector.load %arg2[%c2_12, %c0_13, %c0_14] : memref<4x384x256xf32, #tpu.memory_space<vmem>>, vector<1x384x256xf32>
    %16 = vector.shape_cast %15 : vector<1x384x256xf32> to vector<384x256xf32>
    %17 = vector.shape_cast %14 : vector<384x256xf32> to vector<1x384x256xf32>
    tpu.vector_store %arg2[%c2_12, %c0_13, %c0_14], %17 {strides = array<i32>} : memref<4x384x256xf32, #tpu.memory_space<vmem>>, vector<1x384x256xf32>,
    %c3 = arith.constant 3 : index
    %c0_15 = arith.constant 0 : index
    %c0_16 = arith.constant 0 : index
    %18 = vector.load %arg1[%c3, %c0_15, %c0_16] : memref<4x256x384xf32, #tpu.memory_space<vmem>>, vector<1x256x384xf32>
    %19 = vector.shape_cast %18 : vector<1x256x384xf32> to vector<256x384xf32>
    %20 = tpu.transpose %19, [1, 0] : vector<256x384xf32> -> vector<384x256xf32>
    %c3_17 = arith.constant 3 : index
    %c0_18 = arith.constant 0 : index
    %c0_19 = arith.constant 0 : index
    %21 = vector.load %arg2[%c3_17, %c0_18, %c0_19] : memref<4x384x256xf32, #tpu.memory_space<vmem>>, vector<1x384x256xf32>
    %22 = vector.shape_cast %21 : vector<1x384x256xf32> to vector<384x256xf32>
    %23 = vector.shape_cast %20 : vector<384x256xf32> to vector<1x384x256xf32>
    tpu.vector_store %arg2[%c3_17, %c0_18, %c0_19], %23 {strides = array<i32>} : memref<4x384x256xf32, #tpu.memory_space<vmem>>, vector<1x384x256xf32>,
    return
  }
  func.func @transform_0(%arg0: i32) -> (i32, i32, i32) {
    %c0_i32 = arith.constant 0 : i32
    %c0_i32_0 = arith.constant 0 : i32
    %c0_i32_1 = arith.constant 0 : i32
    return %arg0, %c0_i32, %c0_i32_0 : i32, i32, i32
  }
  func.func @transform_1(%arg0: i32) -> (i32, i32, i32) {
    %c0_i32 = arith.constant 0 : i32
    %c0_i32_0 = arith.constant 0 : i32
    %c0_i32_1 = arith.constant 0 : i32
    return %arg0, %c0_i32, %c0_i32_0 : i32, i32, i32
  }
}

</mosaic_0001>

<llo_original>
// kernel: tpu_custom_call.1
$region0: #{tpu_custom_call.1}
  #allocation0 [shape = 'u32[]', space=smem, size = 0x4, offset = 0x4, fixed_abs, tag = 'smem constant byte address 0x4 - core index']
  #allocation1 [shape = 'u32[144,128]{1,0:T(1,128)}', space=vmem, size = 0x12000, scoped, tag = 'internal scratch']
  %s0 = inlined_call_operand.hbm [shape: f32[4,256,384], index: 0, kind: input, shape index: {}]
  %s1 = inlined_call_operand.hbm [shape: f32[4,384,256], index: 1, kind: output, shape index: {}]
  %s2 = sld [smem:[#allocation0]]
  $region18: #{tpu_custom_call.1} parent=0
    _
  %s4 = ssub.s32 1, %s2
  %s5 = scalar_select 0, %s4, %s2
  $region1: #{tpu_custom_call.1} parent=0
    #allocation2 [shape = 'u8[1572864]{0}', space=vmem, size = 0x180000, scoped, tag = 'input window, operand 0, single buffered']
    #allocation3 [shape = 's32[1]{0}', space=sflag, size = 0x4, scoped, tag = 'scoped memory for tpu_custom_call.1']
    #allocation4 [shape = 's32[1]{0}', space=sflag, size = 0x4, scoped, tag = 'scoped memory for tpu_custom_call.1']
    #allocation5 [shape = 'u8[1572864]{0}', space=vmem, size = 0x180000, scoped, tag = 'output window, operand 0, single buffered']
    %6 = vsyncpa [#allocation3], 0
    %7 = vsyncpa [#allocation4], 0
    // Predicated region
    $region2: #{tpu_custom_call.1} parent=1 // pred_check
      _
    $region3: #{tpu_custom_call.1} parent=1 // pred_check_branch
      %9 = sbr.rel (0) target = $region5
    $region4: #{tpu_custom_call.1} parent=1 // pred_region
      %s11 = ssub.s32 49152, 49152
      %12 = vsyncadd [#allocation3], %s11
      %s13 = sshll.u32 [#allocation2], 4
      %s14 = int_to_ptr.vmem [resolvable:$true] %s13
      %19 = dma.hbm_to_vmem [thread:$0]  %s0, 49152, %s14, [#allocation3], 384, 384, 24
    $region5: #{tpu_custom_call.1} parent=1 // pred_fallthru
      _
    // Predicated region
    $region6: #{tpu_custom_call.1} parent=1 // pred_check
      _
    $region7: #{tpu_custom_call.1} parent=1 // pred_check_branch
      %21 = sbr.rel (0) target = $region9
    $region8: #{tpu_custom_call.1} parent=1 // pred_region
      %22 = dma.done [#allocation3], 49152
    $region9: #{tpu_custom_call.1} parent=1 // pred_fallthru
      _
    %v23 = vld [vmem:[#allocation2] sm:$0xff]
    %v24 = vld [vmem:[#allocation2 + $0x8] sm:$0xff]
    %v25 = vld [vmem:[#allocation2 + $0x10] sm:$0xff]
    %v26 = vld [vmem:[#allocation2 + $0x18] sm:$0xff]
    %v27 = vld [vmem:[#allocation2 + $0x20] sm:$0xff]
    %v28 = vld [vmem:[#allocation2 + $0x28] sm:$0xff]
    %v29 = vld [vmem:[#allocation2 + $0x30] sm:$0xff]
    %v30 = vld [vmem:[#allocation2 + $0x38] sm:$0xff]
    %v31 = vld [vmem:[#allocation2 + $0x40] sm:$0xff]
    %v32 = vld [vmem:[#allocation2 + $0x48] sm:$0xff]
    %v33 = vld [vmem:[#allocation2 + $0x50] sm:$0xff]
    %v34 = vld [vmem:[#allocation2 + $0x58] sm:$0xff]
    %v35 = vld [vmem:[#allocation2 + $0x60] sm:$0xff]
    %v36 = vld [vmem:[#allocation2 + $0x68] sm:$0xff]
    %v37 = vld [vmem:[#allocation2 + $0x70] sm:$0xff]
    %v38 = vld [vmem:[#allocation2 + $0x78] sm:$0xff]
    %v39 = vld [vmem:[#allocation2 + $0x80] sm:$0xff]
    %v40 = vld [vmem:[#allocation2 + $0x88] sm:$0xff]
    %v41 = vld [vmem:[#allocation2 + $0x90] sm:$0xff]
    %v42 = vld [vmem:[#allocation2 + $0x98] sm:$0xff]
    %v43 = vld [vmem:[#allocation2 + $0xa0] sm:$0xff]
    %v44 = vld [vmem:[#allocation2 + $0xa8] sm:$0xff]
    %v45 = vld [vmem:[#allocation2 + $0xb0] sm:$0xff]
    %v46 = vld [vmem:[#allocation2 + $0xb8] sm:$0xff]
    %v47 = vld [vmem:[#allocation2 + $0xc0] sm:$0xff]
    %v48 = vld [vmem:[#allocation2 + $0xc8] sm:$0xff]
    %v49 = vld [vmem:[#allocation2 + $0xd0] sm:$0xff]
    %v50 = vld [vmem:[#allocation2 + $0xd8] sm:$0xff]
    %v51 = vld [vmem:[#allocation2 + $0xe0] sm:$0xff]
    %v52 = vld [vmem:[#allocation2 + $0xe8] sm:$0xff]
    %v53 = vld [vmem:[#allocation2 + $0xf0] sm:$0xff]
    %v54 = vld [vmem:[#allocation2 + $0xf8] sm:$0xff]
    %v55 = vld [vmem:[#allocation2 + $0x100] sm:$0xff]
    %v56 = vld [vmem:[#allocation2 + $0x108] sm:$0xff]
    %v57 = vld [vmem:[#allocation2 + $0x110] sm:$0xff]
    %v58 = vld [vmem:[#allocation2 + $0x118] sm:$0xff]
    %v59 = vld [vmem:[#allocation2 + $0x120] sm:$0xff]
    %v60 = vld [vmem:[#allocation2 + $0x128] sm:$0xff]
    %v61 = vld [vmem:[#allocation2 + $0x130] sm:$0xff]
    %v62 = vld [vmem:[#allocation2 + $0x138] sm:$0xff]
    %v63 = vld [vmem:[#allocation2 + $0x140] sm:$0xff]
    %v64 = vld [vmem:[#allocation2 + $0x148] sm:$0xff]
    %v65 = vld [vmem:[#allocation2 + $0x150] sm:$0xff]
    %v66 = vld [vmem:[#allocation2 + $0x158] sm:$0xff]
    %v67 = vld [vmem:[#allocation2 + $0x160] sm:$0xff]
    %v68 = vld [vmem:[#allocation2 + $0x168] sm:$0xff]
    %v69 = vld [vmem:[#allocation2 + $0x170] sm:$0xff]
    %v70 = vld [vmem:[#allocation2 + $0x178] sm:$0xff]
    %v71 = vld [vmem:[#allocation2 + $0x180] sm:$0xff]
    %v72 = vld [vmem:[#allocation2 + $0x188] sm:$0xff]
    %v73 = vld [vmem:[#allocation2 + $0x190] sm:$0xff]
    %v74 = vld [vmem:[#allocation2 + $0x198] sm:$0xff]
    %v75 = vld [vmem:[#allocation2 + $0x1a0] sm:$0xff]
    %v76 = vld [vmem:[#allocation2 + $0x1a8] sm:$0xff]
    %v77 = vld [vmem:[#allocation2 + $0x1b0] sm:$0xff]
    %v78 = vld [vmem:[#allocation2 + $0x1b8] sm:$0xff]
    %v79 = vld [vmem:[#allocation2 + $0x1c0] sm:$0xff]
    %v80 = vld [vmem:[#allocation2 + $0x1c8] sm:$0xff]
    %v81 = vld [vmem:[#allocation2 + $0x1d0] sm:$0xff]
    %v82 = vld [vmem:[#allocation2 + $0x1d8] sm:$0xff]
    %v83 = vld [vmem:[#allocation2 + $0x1e0] sm:$0xff]
    %v84 = vld [vmem:[#allocation2 + $0x1e8] sm:$0xff]
    %v85 = vld [vmem:[#allocation2 + $0x1f0] sm:$0xff]
    %v86 = vld [vmem:[#allocation2 + $0x1f8] sm:$0xff]
    %v87 = vld [vmem:[#allocation2 + $0x200] sm:$0xff]
    %v88 = vld [vmem:[#allocation2 + $0x208] sm:$0xff]
    %v89 = vld [vmem:[#allocation2 + $0x210] sm:$0xff]
    %v90 = vld [vmem:[#allocation2 + $0x218] sm:$0xff]
    %v91 = vld [vmem:[#allocation2 + $0x220] sm:$0xff]
    %v92 = vld [vmem:[#allocation2 + $0x228] sm:$0xff]
    %v93 = vld [vmem:[#allocation2 + $0x230] sm:$0xff]
    %v94 = vld [vmem:[#allocation2 + $0x238] sm:$0xff]
    %v95 = vld [vmem:[#allocation2 + $0x240] sm:$0xff]
    %v96 = vld [vmem:[#allocation2 + $0x248] sm:$0xff]
    %v97 = vld [vmem:[#allocation2 + $0x250] sm:$0xff]
    %v98 = vld [vmem:[#allocation2 + $0x258] sm:$0xff]
    %v99 = vld [vmem:[#allocation2 + $0x260] sm:$0xff]
    %v100 = vld [vmem:[#allocation2 + $0x268] sm:$0xff]
    %v101 = vld [vmem:[#allocation2 + $0x270] sm:$0xff]
    %v102 = vld [vmem:[#allocation2 + $0x278] sm:$0xff]
    %v103 = vld [vmem:[#allocation2 + $0x280] sm:$0xff]
    %v104 = vld [vmem:[#allocation2 + $0x288] sm:$0xff]
    %v105 = vld [vmem:[#allocation2 + $0x290] sm:$0xff]
    %v106 = vld [vmem:[#allocation2 + $0x298] sm:$0xff]
    %v107 = vld [vmem:[#allocation2 + $0x2a0] sm:$0xff]
    %v108 = vld [vmem:[#allocation2 + $0x2a8] sm:$0xff]
    %v109 = vld [vmem:[#allocation2 + $0x2b0] sm:$0xff]
    %v110 = vld [vmem:[#allocation2 + $0x2b8] sm:$0xff]
    %v111 = vld [vmem:[#allocation2 + $0x2c0] sm:$0xff]
    %v112 = vld [vmem:[#allocation2 + $0x2c8] sm:$0xff]
    %v113 = vld [vmem:[#allocation2 + $0x2d0] sm:$0xff]
    %v114 = vld [vmem:[#allocation2 + $0x2d8] sm:$0xff]
    %v115 = vld [vmem:[#allocation2 + $0x2e0] sm:$0xff]
    %v116 = vld [vmem:[#allocation2 + $0x2e8] sm:$0xff]
    %v117 = vld [vmem:[#allocation2 + $0x2f0] sm:$0xff]
    %v118 = vld [vmem:[#allocation2 + $0x2f8] sm:$0xff]
    %119 = vxpose.xlu0.b32.start [1/16] %v23, 128
    %120 = vxpose.xlu0.b32.cont [2/16] %v26, 128
    %121 = vxpose.xlu0.b32.cont [3/16] %v29, 128
    %122 = vxpose.xlu0.b32.cont [4/16] %v32, 128
    %123 = vxpose.xlu0.b32.cont [5/16] %v35, 128
    %124 = vxpose.xlu0.b32.cont [6/16] %v38, 128
    %125 = vxpose.xlu0.b32.cont [7/16] %v41, 128
    %126 = vxpose.xlu0.b32.cont [8/16] %v44, 128
    %127 = vxpose.xlu0.b32.cont [9/16] %v47, 128
    %128 = vxpose.xlu0.b32.cont [10/16] %v50, 128
    %129 = vxpose.xlu0.b32.cont [11/16] %v53, 128
    %130 = vxpose.xlu0.b32.cont [12/16] %v56, 128
    %131 = vxpose.xlu0.b32.cont [13/16] %v59, 128
    %132 = vxpose.xlu0.b32.cont [14/16] %v62, 128
    %133 = vxpose.xlu0.b32.cont [15/16] %v65, 128
    %134 = vxpose.xlu0.b32.end [16/16] %v68, 128
    %v135 = vpop.trf.xlu0
    %v136 = vpop.trf.xlu0
    %v137 = vpop.trf.xlu0
    %v138 = vpop.trf.xlu0
    %v139 = vpop.trf.xlu0
    %v140 = vpop.trf.xlu0
    %v141 = vpop.trf.xlu0
    %v142 = vpop.trf.xlu0
    %v143 = vpop.trf.xlu0
    %v144 = vpop.trf.xlu0
    %v145 = vpop.trf.xlu0
    %v146 = vpop.trf.xlu0
    %v147 = vpop.trf.xlu0
    %v148 = vpop.trf.xlu0
    %v149 = vpop.trf.xlu0
    %v150 = vpop.trf.xlu0
    %151 = vxpose.xlu0.b32.start [1/16] %v24, 128
    %152 = vxpose.xlu0.b32.cont [2/16] %v27, 128
    %153 = vxpose.xlu0.b32.cont [3/16] %v30, 128
    %154 = vxpose.xlu0.b32.cont [4/16] %v33, 128
    %155 = vxpose.xlu0.b32.cont [5/16] %v36, 128
    %156 = vxpose.xlu0.b32.cont [6/16] %v39, 128
    %157 = vxpose.xlu0.b32.cont [7/16] %v42, 128
    %158 = vxpose.xlu0.b32.cont [8/16] %v45, 128
    %159 = vxpose.xlu0.b32.cont [9/16] %v48, 128
    %160 = vxpose.xlu0.b32.cont [10/16] %v51, 128
    %161 = vxpose.xlu0.b32.cont [11/16] %v54, 128
    %162 = vxpose.xlu0.b32.cont [12/16] %v57, 128
    %163 = vxpose.xlu0.b32.cont [13/16] %v60, 128
    %164 = vxpose.xlu0.b32.cont [14/16] %v63, 128
    %165 = vxpose.xlu0.b32.cont [15/16] %v66, 128
    %166 = vxpose.xlu0.b32.end [16/16] %v69, 128
    %v167 = vpop.trf.xlu0
    %v168 = vpop.trf.xlu0
    %v169 = vpop.trf.xlu0
    %v170 = vpop.trf.xlu0
    %v171 = vpop.trf.xlu0
    %v172 = vpop.trf.xlu0
    %v173 = vpop.trf.xlu0
    %v174 = vpop.trf.xlu0
    %v175 = vpop.trf.xlu0
    %v176 = vpop.trf.xlu0
    %v177 = vpop.trf.xlu0
    %v178 = vpop.trf.xlu0
    %v179 = vpop.trf.xlu0
    %v180 = vpop.trf.xlu0
    %v181 = vpop.trf.xlu0
    %v182 = vpop.trf.xlu0
    %183 = vxpose.xlu0.b32.start [1/16] %v25, 128
    %184 = vxpose.xlu0.b32.cont [2/16] %v28, 128
    %185 = vxpose.xlu0.b32.cont [3/16] %v31, 128
    %186 = vxpose.xlu0.b32.cont [4/16] %v34, 128
    %187 = vxpose.xlu0.b32.cont [5/16] %v37, 128
    %188 = vxpose.xlu0.b32.cont [6/16] %v40, 128
    %189 = vxpose.xlu0.b32.cont [7/16] %v43, 128
    %190 = vxpose.xlu0.b32.cont [8/16] %v46, 128
    %191 = vxpose.xlu0.b32.cont [9/16] %v49, 128
    %192 = vxpose.xlu0.b32.cont [10/16] %v52, 128
    %193 = vxpose.xlu0.b32.cont [11/16] %v55, 128
    %194 = vxpose.xlu0.b32.cont [12/16] %v58, 128
    %195 = vxpose.xlu0.b32.cont [13/16] %v61, 128
    %196 = vxpose.xlu0.b32.cont [14/16] %v64, 128
    %197 = vxpose.xlu0.b32.cont [15/16] %v67, 128
    %198 = vxpose.xlu0.b32.end [16/16] %v70, 128
    %v199 = vpop.trf.xlu0
    %v200 = vpop.trf.xlu0
    %v201 = vpop.trf.xlu0
    %v202 = vpop.trf.xlu0
    %v203 = vpop.trf.xlu0
    %v204 = vpop.trf.xlu0
    %v205 = vpop.trf.xlu0
    %v206 = vpop.trf.xlu0
    %v207 = vpop.trf.xlu0
    %v208 = vpop.trf.xlu0
    %v209 = vpop.trf.xlu0
    %v210 = vpop.trf.xlu0
    %v211 = vpop.trf.xlu0
    %v212 = vpop.trf.xlu0
    %v213 = vpop.trf.xlu0
    %v214 = vpop.trf.xlu0
    %215 = vxpose.xlu0.b32.start [1/16] %v71, 128
    %216 = vxpose.xlu0.b32.cont [2/16] %v74, 128
    %217 = vxpose.xlu0.b32.cont [3/16] %v77, 128
    %218 = vxpose.xlu0.b32.cont [4/16] %v80, 128
    %219 = vxpose.xlu0.b32.cont [5/16] %v83, 128
    %220 = vxpose.xlu0.b32.cont [6/16] %v86, 128
    %221 = vxpose.xlu0.b32.cont [7/16] %v89, 128
    %222 = vxpose.xlu0.b32.cont [8/16] %v92, 128
    %223 = vxpose.xlu0.b32.cont [9/16] %v95, 128
    %224 = vxpose.xlu0.b32.cont [10/16] %v98, 128
    %225 = vxpose.xlu0.b32.cont [11/16] %v101, 128
    %226 = vxpose.xlu0.b32.cont [12/16] %v104, 128
    %227 = vxpose.xlu0.b32.cont [13/16] %v107, 128
    %228 = vxpose.xlu0.b32.cont [14/16] %v110, 128
    %229 = vxpose.xlu0.b32.cont [15/16] %v113, 128
    %230 = vxpose.xlu0.b32.end [16/16] %v116, 128
    %v231 = vpop.trf.xlu0
    %v232 = vpop.trf.xlu0
    %v233 = vpop.trf.xlu0
    %v234 = vpop.trf.xlu0
    %v235 = vpop.trf.xlu0
    %v236 = vpop.trf.xlu0
    %v237 = vpop.trf.xlu0
    %v238 = vpop.trf.xlu0
    %v239 = vpop.trf.xlu0
    %v240 = vpop.trf.xlu0
    %v241 = vpop.trf.xlu0
    %v242 = vpop.trf.xlu0
    %v243 = vpop.trf.xlu0
    %v244 = vpop.trf.xlu0
    %v245 = vpop.trf.xlu0
    %v246 = vpop.trf.xlu0
    %247 = vxpose.xlu0.b32.start [1/16] %v72, 128
    %248 = vxpose.xlu0.b32.cont [2/16] %v75, 128
    %249 = vxpose.xlu0.b32.cont [3/16] %v78, 128
    %250 = vxpose.xlu0.b32.cont [4/16] %v81, 128
    %251 = vxpose.xlu0.b32.cont [5/16] %v84, 128
    %252 = vxpose.xlu0.b32.cont [6/16] %v87, 128
    %253 = vxpose.xlu0.b32.cont [7/16] %v90, 128
    %254 = vxpose.xlu0.b32.cont [8/16] %v93, 128
    %255 = vxpose.xlu0.b32.cont [9/16] %v96, 128
    %256 = vxpose.xlu0.b32.cont [10/16] %v99, 128
    %257 = vxpose.xlu0.b32.cont [11/16] %v102, 128
    %258 = vxpose.xlu0.b32.cont [12/16] %v105, 128
    %259 = vxpose.xlu0.b32.cont [13/16] %v108, 128
    %260 = vxpose.xlu0.b32.cont [14/16] %v111, 128
    %261 = vxpose.xlu0.b32.cont [15/16] %v114, 128
    %262 = vxpose.xlu0.b32.end [16/16] %v117, 128
    %v263 = vpop.trf.xlu0
    %v264 = vpop.trf.xlu0
    %v265 = vpop.trf.xlu0
    %v266 = vpop.trf.xlu0
    %v267 = vpop.trf.xlu0
    %v268 = vpop.trf.xlu0
    %v269 = vpop.trf.xlu0
    %v270 = vpop.trf.xlu0
    %v271 = vpop.trf.xlu0
    %v272 = vpop.trf.xlu0
    %v273 = vpop.trf.xlu0
    %v274 = vpop.trf.xlu0
    %v275 = vpop.trf.xlu0
    %v276 = vpop.trf.xlu0
    %v277 = vpop.trf.xlu0
    %v278 = vpop.trf.xlu0
    %279 = vxpose.xlu0.b32.start [1/16] %v73, 128
    %280 = vxpose.xlu0.b32.cont [2/16] %v76, 128
    %281 = vxpose.xlu0.b32.cont [3/16] %v79, 128
    %282 = vxpose.xlu0.b32.cont [4/16] %v82, 128
    %283 = vxpose.xlu0.b32.cont [5/16] %v85, 128
    %284 = vxpose.xlu0.b32.cont [6/16] %v88, 128
    %285 = vxpose.xlu0.b32.cont [7/16] %v91, 128
    %286 = vxpose.xlu0.b32.cont [8/16] %v94, 128
    %287 = vxpose.xlu0.b32.cont [9/16] %v97, 128
    %288 = vxpose.xlu0.b32.cont [10/16] %v100, 128
    %289 = vxpose.xlu0.b32.cont [11/16] %v103, 128
    %290 = vxpose.xlu0.b32.cont [12/16] %v106, 128
    %291 = vxpose.xlu0.b32.cont [13/16] %v109, 128
    %292 = vxpose.xlu0.b32.cont [14/16] %v112, 128
    %293 = vxpose.xlu0.b32.cont [15/16] %v115, 128
    %294 = vxpose.xlu0.b32.end [16/16] %v118, 128
    %v295 = vpop.trf.xlu0
    %v296 = vpop.trf.xlu0
    %v297 = vpop.trf.xlu0
    %v298 = vpop.trf.xlu0
    %v299 = vpop.trf.xlu0
    %v300 = vpop.trf.xlu0
    %v301 = vpop.trf.xlu0
    %v302 = vpop.trf.xlu0
    %v303 = vpop.trf.xlu0
    %v304 = vpop.trf.xlu0
    %v305 = vpop.trf.xlu0
    %v306 = vpop.trf.xlu0
    %v307 = vpop.trf.xlu0
    %v308 = vpop.trf.xlu0
    %v309 = vpop.trf.xlu0
    %v310 = vpop.trf.xlu0
    %311 = vst [vmem:[#allocation5] sm:$0xff] %v135
    %312 = vst [vmem:[#allocation5 + $0x8] sm:$0xff] %v231
    %313 = vst [vmem:[#allocation5 + $0x10] sm:$0xff] %v136
    %314 = vst [vmem:[#allocation5 + $0x18] sm:$0xff] %v232
    %315 = vst [vmem:[#allocation5 + $0x20] sm:$0xff] %v137
    %316 = vst [vmem:[#allocation5 + $0x28] sm:$0xff] %v233
    %317 = vst [vmem:[#allocation5 + $0x30] sm:$0xff] %v138
    %318 = vst [vmem:[#allocation5 + $0x38] sm:$0xff] %v234
    %319 = vst [vmem:[#allocation5 + $0x40] sm:$0xff] %v139
    %320 = vst [vmem:[#allocation5 + $0x48] sm:$0xff] %v235
    %321 = vst [vmem:[#allocation5 + $0x50] sm:$0xff] %v140
    %322 = vst [vmem:[#allocation5 + $0x58] sm:$0xff] %v236
    %323 = vst [vmem:[#allocation5 + $0x60] sm:$0xff] %v141
    %324 = vst [vmem:[#allocation5 + $0x68] sm:$0xff] %v237
    %325 = vst [vmem:[#allocation5 + $0x70] sm:$0xff] %v142
    %326 = vst [vmem:[#allocation5 + $0x78] sm:$0xff] %v238
    %327 = vst [vmem:[#allocation5 + $0x80] sm:$0xff] %v143
    %328 = vst [vmem:[#allocation5 + $0x88] sm:$0xff] %v239
    %329 = vst [vmem:[#allocation5 + $0x90] sm:$0xff] %v144
    %330 = vst [vmem:[#allocation5 + $0x98] sm:$0xff] %v240
    %331 = vst [vmem:[#allocation5 + $0xa0] sm:$0xff] %v145
    %332 = vst [vmem:[#allocation5 + $0xa8] sm:$0xff] %v241
    %333 = vst [vmem:[#allocation5 + $0xb0] sm:$0xff] %v146
    %334 = vst [vmem:[#allocation5 + $0xb8] sm:$0xff] %v242
    %335 = vst [vmem:[#allocation5 + $0xc0] sm:$0xff] %v147
    %336 = vst [vmem:[#allocation5 + $0xc8] sm:$0xff] %v243
    %337 = vst [vmem:[#allocation5 + $0xd0] sm:$0xff] %v148
    %338 = vst [vmem:[#allocation5 + $0xd8] sm:$0xff] %v244
    %339 = vst [vmem:[#allocation5 + $0xe0] sm:$0xff] %v149
    %340 = vst [vmem:[#allocation5 + $0xe8] sm:$0xff] %v245
    %341 = vst [vmem:[#allocation5 + $0xf0] sm:$0xff] %v150
    %342 = vst [vmem:[#allocation5 + $0xf8] sm:$0xff] %v246
    %343 = vst [vmem:[#allocation5 + $0x100] sm:$0xff] %v167
    %344 = vst [vmem:[#allocation5 + $0x108] sm:$0xff] %v263
    %345 = vst [vmem:[#allocation5 + $0x110] sm:$0xff] %v168
    %346 = vst [vmem:[#allocation5 + $0x118] sm:$0xff] %v264
    %347 = vst [vmem:[#allocation5 + $0x120] sm:$0xff] %v169
    %348 = vst [vmem:[#allocation5 + $0x128] sm:$0xff] %v265
    %349 = vst [vmem:[#allocation5 + $0x130] sm:$0xff] %v170
    %350 = vst [vmem:[#allocation5 + $0x138] sm:$0xff] %v266
    %351 = vst [vmem:[#allocation5 + $0x140] sm:$0xff] %v171
    %352 = vst [vmem:[#allocation5 + $0x148] sm:$0xff] %v267
    %353 = vst [vmem:[#allocation5 + $0x150] sm:$0xff] %v172
    %354 = vst [vmem:[#allocation5 + $0x158] sm:$0xff] %v268
    %355 = vst [vmem:[#allocation5 + $0x160] sm:$0xff] %v173
    %356 = vst [vmem:[#allocation5 + $0x168] sm:$0xff] %v269
    %357 = vst [vmem:[#allocation5 + $0x170] sm:$0xff] %v174
    %358 = vst [vmem:[#allocation5 + $0x178] sm:$0xff] %v270
    %359 = vst [vmem:[#allocation5 + $0x180] sm:$0xff] %v175
    %360 = vst [vmem:[#allocation5 + $0x188] sm:$0xff] %v271
    %361 = vst [vmem:[#allocation5 + $0x190] sm:$0xff] %v176
    %362 = vst [vmem:[#allocation5 + $0x198] sm:$0xff] %v272
    %363 = vst [vmem:[#allocation5 + $0x1a0] sm:$0xff] %v177
    %364 = vst [vmem:[#allocation5 + $0x1a8] sm:$0xff] %v273
    %365 = vst [vmem:[#allocation5 + $0x1b0] sm:$0xff] %v178
    %366 = vst [vmem:[#allocation5 + $0x1b8] sm:$0xff] %v274
    %367 = vst [vmem:[#allocation5 + $0x1c0] sm:$0xff] %v179
    %368 = vst [vmem:[#allocation5 + $0x1c8] sm:$0xff] %v275
    %369 = vst [vmem:[#allocation5 + $0x1d0] sm:$0xff] %v180
    %370 = vst [vmem:[#allocation5 + $0x1d8] sm:$0xff] %v276
    %371 = vst [vmem:[#allocation5 + $0x1e0] sm:$0xff] %v181
    %372 = vst [vmem:[#allocation5 + $0x1e8] sm:$0xff] %v277
    %373 = vst [vmem:[#allocation5 + $0x1f0] sm:$0xff] %v182
    %374 = vst [vmem:[#allocation5 + $0x1f8] sm:$0xff] %v278
    %375 = vst [vmem:[#allocation5 + $0x200] sm:$0xff] %v199
    %376 = vst [vmem:[#allocation5 + $0x208] sm:$0xff] %v295
    %377 = vst [vmem:[#allocation5 + $0x210] sm:$0xff] %v200
    %378 = vst [vmem:[#allocation5 + $0x218] sm:$0xff] %v296
    %379 = vst [vmem:[#allocation5 + $0x220] sm:$0xff] %v201
    %380 = vst [vmem:[#allocation5 + $0x228] sm:$0xff] %v297
    %381 = vst [vmem:[#allocation5 + $0x230] sm:$0xff] %v202
    %382 = vst [vmem:[#allocation5 + $0x238] sm:$0xff] %v298
    %383 = vst [vmem:[#allocation5 + $0x240] sm:$0xff] %v203
    %384 = vst [vmem:[#allocation5 + $0x248] sm:$0xff] %v299
    %385 = vst [vmem:[#allocation5 + $0x250] sm:$0xff] %v204
    %386 = vst [vmem:[#allocation5 + $0x258] sm:$0xff] %v300
    %387 = vst [vmem:[#allocation5 + $0x260] sm:$0xff] %v205
    %388 = vst [vmem:[#allocation5 + $0x268] sm:$0xff] %v301
    %389 = vst [vmem:[#allocation5 + $0x270] sm:$0xff] %v206
    %390 = vst [vmem:[#allocation5 + $0x278] sm:$0xff] %v302
    %391 = vst [vmem:[#allocation5 + $0x280] sm:$0xff] %v207
    %392 = vst [vmem:[#allocation5 + $0x288] sm:$0xff] %v303
    %393 = vst [vmem:[#allocation5 + $0x290] sm:$0xff] %v208
    %394 = vst [vmem:[#allocation5 + $0x298] sm:$0xff] %v304
    %395 = vst [vmem:[#allocation5 + $0x2a0] sm:$0xff] %v209
    %396 = vst [vmem:[#allocation5 + $0x2a8] sm:$0xff] %v305
    %397 = vst [vmem:[#allocation5 + $0x2b0] sm:$0xff] %v210
    %398 = vst [vmem:[#allocation5 + $0x2b8] sm:$0xff] %v306
    %399 = vst [vmem:[#allocation5 + $0x2c0] sm:$0xff] %v211
    %400 = vst [vmem:[#allocation5 + $0x2c8] sm:$0xff] %v307
    %401 = vst [vmem:[#allocation5 + $0x2d0] sm:$0xff] %v212
    %402 = vst [vmem:[#allocation5 + $0x2d8] sm:$0xff] %v308
    %403 = vst [vmem:[#allocation5 + $0x2e0] sm:$0xff] %v213
    %404 = vst [vmem:[#allocation5 + $0x2e8] sm:$0xff] %v309
    %405 = vst [vmem:[#allocation5 + $0x2f0] sm:$0xff] %v214
    %406 = vst [vmem:[#allocation5 + $0x2f8] sm:$0xff] %v310
    %s407 = scalar_lea.vmem [#allocation2], 768
    %v408 = vld [vmem:[%s407] sm:$0xff]
    %v409 = vld [vmem:[%s407 + $0x8] sm:$0xff]
    %v410 = vld [vmem:[%s407 + $0x10] sm:$0xff]
    %v411 = vld [vmem:[%s407 + $0x18] sm:$0xff]
    %v412 = vld [vmem:[%s407 + $0x20] sm:$0xff]
    %v413 = vld [vmem:[%s407 + $0x28] sm:$0xff]
    %v414 = vld [vmem:[%s407 + $0x30] sm:$0xff]
    %v415 = vld [vmem:[%s407 + $0x38] sm:$0xff]
    %v416 = vld [vmem:[%s407 + $0x40] sm:$0xff]
    %v417 = vld [vmem:[%s407 + $0x48] sm:$0xff]
    %v418 = vld [vmem:[%s407 + $0x50] sm:$0xff]
    %v419 = vld [vmem:[%s407 + $0x58] sm:$0xff]
    %v420 = vld [vmem:[%s407 + $0x60] sm:$0xff]
    %v421 = vld [vmem:[%s407 + $0x68] sm:$0xff]
    %v422 = vld [vmem:[%s407 + $0x70] sm:$0xff]
    %v423 = vld [vmem:[%s407 + $0x78] sm:$0xff]
    %v424 = vld [vmem:[%s407 + $0x80] sm:$0xff]
    %v425 = vld [vmem:[%s407 + $0x88] sm:$0xff]
    %v426 = vld [vmem:[%s407 + $0x90] sm:$0xff]
    %v427 = vld [vmem:[%s407 + $0x98] sm:$0xff]
    %v428 = vld [vmem:[%s407 + $0xa0] sm:$0xff]
    %v429 = vld [vmem:[%s407 + $0xa8] sm:$0xff]
    %v430 = vld [vmem:[%s407 + $0xb0] sm:$0xff]
    %v431 = vld [vmem:[%s407 + $0xb8] sm:$0xff]
    %v432 = vld [vmem:[%s407 + $0xc0] sm:$0xff]
    %v433 = vld [vmem:[%s407 + $0xc8] sm:$0xff]
    %v434 = vld [vmem:[%s407 + $0xd0] sm:$0xff]
    %v435 = vld [vmem:[%s407 + $0xd8] sm:$0xff]
    %v436 = vld [vmem:[%s407 + $0xe0] sm:$0xff]
    %v437 = vld [vmem:[%s407 + $0xe8] sm:$0xff]
    %v438 = vld [vmem:[%s407 + $0xf0] sm:$0xff]
    %v439 = vld [vmem:[%s407 + $0xf8] sm:$0xff]
    %v440 = vld [vmem:[%s407 + $0x100] sm:$0xff]
    %v441 = vld [vmem:[%s407 + $0x108] sm:$0xff]
    %v442 = vld [vmem:[%s407 + $0x110] sm:$0xff]
    %v443 = vld [vmem:[%s407 + $0x118] sm:$0xff]
    %v444 = vld [vmem:[%s407 + $0x120] sm:$0xff]
    %v445 = vld [vmem:[%s407 + $0x128] sm:$0xff]
    %v446 = vld [vmem:[%s407 + $0x130] sm:$0xff]
    %v447 = vld [vmem:[%s407 + $0x138] sm:$0xff]
    %v448 = vld [vmem:[%s407 + $0x140] sm:$0xff]
    %v449 = vld [vmem:[%s407 + $0x148] sm:$0xff]
    %v450 = vld [vmem:[%s407 + $0x150] sm:$0xff]
    %v451 = vld [vmem:[%s407 + $0x158] sm:$0xff]
    %v452 = vld [vmem:[%s407 + $0x160] sm:$0xff]
    %v453 = vld [vmem:[%s407 + $0x168] sm:$0xff]
    %v454 = vld [vmem:[%s407 + $0x170] sm:$0xff]
    %v455 = vld [vmem:[%s407 + $0x178] sm:$0xff]
    %v456 = vld [vmem:[%s407 + $0x180] sm:$0xff]
    %v457 = vld [vmem:[%s407 + $0x188] sm:$0xff]
    %v458 = vld [vmem:[%s407 + $0x190] sm:$0xff]
    %v459 = vld [vmem:[%s407 + $0x198] sm:$0xff]
    %v460 = vld [vmem:[%s407 + $0x1a0] sm:$0xff]
    %v461 = vld [vmem:[%s407 + $0x1a8] sm:$0xff]
    %v462 = vld [vmem:[%s407 + $0x1b0] sm:$0xff]
    %v463 = vld [vmem:[%s407 + $0x1b8] sm:$0xff]
    %v464 = vld [vmem:[%s407 + $0x1c0] sm:$0xff]
    %v465 = vld [vmem:[%s407 + $0x1c8] sm:$0xff]
    %v466 = vld [vmem:[%s407 + $0x1d0] sm:$0xff]
    %v467 = vld [vmem:[%s407 + $0x1d8] sm:$0xff]
    %v468 = vld [vmem:[%s407 + $0x1e0] sm:$0xff]
    %v469 = vld [vmem:[%s407 + $0x1e8] sm:$0xff]
    %v470 = vld [vmem:[%s407 + $0x1f0] sm:$0xff]
    %v471 = vld [vmem:[%s407 + $0x1f8] sm:$0xff]
    %v472 = vld [vmem:[%s407 + $0x200] sm:$0xff]
    %v473 = vld [vmem:[%s407 + $0x208] sm:$0xff]
    %v474 = vld [vmem:[%s407 + $0x210] sm:$0xff]
    %v475 = vld [vmem:[%s407 + $0x218] sm:$0xff]
    %v476 = vld [vmem:[%s407 + $0x220] sm:$0xff]
    %v477 = vld [vmem:[%s407 + $0x228] sm:$0xff]
    %v478 = vld [vmem:[%s407 + $0x230] sm:$0xff]
    %v479 = vld [vmem:[%s407 + $0x238] sm:$0xff]
    %v480 = vld [vmem:[%s407 + $0x240] sm:$0xff]
    %v481 = vld [vmem:[%s407 + $0x248] sm:$0xff]
    %v482 = vld [vmem:[%s407 + $0x250] sm:$0xff]
    %v483 = vld [vmem:[%s407 + $0x258] sm:$0xff]
    %v484 = vld [vmem:[%s407 + $0x260] sm:$0xff]
    %v485 = vld [vmem:[%s407 + $0x268] sm:$0xff]
    %v486 = vld [vmem:[%s407 + $0x270] sm:$0xff]
    %v487 = vld [vmem:[%s407 + $0x278] sm:$0xff]
    %v488 = vld [vmem:[%s407 + $0x280] sm:$0xff]
    %v489 = vld [vmem:[%s407 + $0x288] sm:$0xff]
    %v490 = vld [vmem:[%s407 + $0x290] sm:$0xff]
    %v491 = vld [vmem:[%s407 + $0x298] sm:$0xff]
    %v492 = vld [vmem:[%s407 + $0x2a0] sm:$0xff]
    %v493 = vld [vmem:[%s407 + $0x2a8] sm:$0xff]
    %v494 = vld [vmem:[%s407 + $0x2b0] sm:$0xff]
    %v495 = vld [vmem:[%s407 + $0x2b8] sm:$0xff]
    %v496 = vld [vmem:[%s407 + $0x2c0] sm:$0xff]
    %v497 = vld [vmem:[%s407 + $0x2c8] sm:$0xff]
    %v498 = vld [vmem:[%s407 + $0x2d0] sm:$0xff]
    %v499 = vld [vmem:[%s407 + $0x2d8] sm:$0xff]
    %v500 = vld [vmem:[%s407 + $0x2e0] sm:$0xff]
    %v501 = vld [vmem:[%s407 + $0x2e8] sm:$0xff]
    %v502 = vld [vmem:[%s407 + $0x2f0] sm:$0xff]
    %v503 = vld [vmem:[%s407 + $0x2f8] sm:$0xff]
    %504 = vxpose.xlu0.b32.start [1/16] %v408, 128
    %505 = vxpose.xlu0.b32.cont [2/16] %v411, 128
    %506 = vxpose.xlu0.b32.cont [3/16] %v414, 128
    %507 = vxpose.xlu0.b32.cont [4/16] %v417, 128
    %508 = vxpose.xlu0.b32.cont [5/16] %v420, 128
    %509 = vxpose.xlu0.b32.cont [6/16] %v423, 128
    %510 = vxpose.xlu0.b32.cont [7/16] %v426, 128
    %511 = vxpose.xlu0.b32.cont [8/16] %v429, 128
    %512 = vxpose.xlu0.b32.cont [9/16] %v432, 128
    %513 = vxpose.xlu0.b32.cont [10/16] %v435, 128
    %514 = vxpose.xlu0.b32.cont [11/16] %v438, 128
    %515 = vxpose.xlu0.b32.cont [12/16] %v441, 128
    %516 = vxpose.xlu0.b32.cont [13/16] %v444, 128
    %517 = vxpose.xlu0.b32.cont [14/16] %v447, 128
    %518 = vxpose.xlu0.b32.cont [15/16] %v450, 128
    %519 = vxpose.xlu0.b32.end [16/16] %v453, 128
    %v520 = vpop.trf.xlu0
    %v521 = vpop.trf.xlu0
    %v522 = vpop.trf.xlu0
    %v523 = vpop.trf.xlu0
    %v524 = vpop.trf.xlu0
    %v525 = vpop.trf.xlu0
    %v526 = vpop.trf.xlu0
    %v527 = vpop.trf.xlu0
    %v528 = vpop.trf.xlu0
    %v529 = vpop.trf.xlu0
    %v530 = vpop.trf.xlu0
    %v531 = vpop.trf.xlu0
    %v532 = vpop.trf.xlu0
    %v533 = vpop.trf.xlu0
    %v534 = vpop.trf.xlu0
    %v535 = vpop.trf.xlu0
    %536 = vxpose.xlu0.b32.start [1/16] %v409, 128
    %537 = vxpose.xlu0.b32.cont [2/16] %v412, 128
    %538 = vxpose.xlu0.b32.cont [3/16] %v415, 128
    %539 = vxpose.xlu0.b32.cont [4/16] %v418, 128
    %540 = vxpose.xlu0.b32.cont [5/16] %v421, 128
    %541 = vxpose.xlu0.b32.cont [6/16] %v424, 128
    %542 = vxpose.xlu0.b32.cont [7/16] %v427, 128
    %543 = vxpose.xlu0.b32.cont [8/16] %v430, 128
    %544 = vxpose.xlu0.b32.cont [9/16] %v433, 128
    %545 = vxpose.xlu0.b32.cont [10/16] %v436, 128
    %546 = vxpose.xlu0.b32.cont [11/16] %v439, 128
    %547 = vxpose.xlu0.b32.cont [12/16] %v442, 128
    %548 = vxpose.xlu0.b32.cont [13/16] %v445, 128
    %549 = vxpose.xlu0.b32.cont [14/16] %v448, 128
    %550 = vxpose.xlu0.b32.cont [15/16] %v451, 128
    %551 = vxpose.xlu0.b32.end [16/16] %v454, 128
    %v552 = vpop.trf.xlu0
    %v553 = vpop.trf.xlu0
    %v554 = vpop.trf.xlu0
    %v555 = vpop.trf.xlu0
    %v556 = vpop.trf.xlu0
    %v557 = vpop.trf.xlu0
    %v558 = vpop.trf.xlu0
    %v559 = vpop.trf.xlu0
    %v560 = vpop.trf.xlu0
    %v561 = vpop.trf.xlu0
    %v562 = vpop.trf.xlu0
    %v563 = vpop.trf.xlu0
    %v564 = vpop.trf.xlu0
    %v565 = vpop.trf.xlu0
    %v566 = vpop.trf.xlu0
    %v567 = vpop.trf.xlu0
    %568 = vxpose.xlu0.b32.start [1/16] %v410, 128
    %569 = vxpose.xlu0.b32.cont [2/16] %v413, 128
    %570 = vxpose.xlu0.b32.cont [3/16] %v416, 128
    %571 = vxpose.xlu0.b32.cont [4/16] %v419, 128
    %572 = vxpose.xlu0.b32.cont [5/16] %v422, 128
    %573 = vxpose.xlu0.b32.cont [6/16] %v425, 128
    %574 = vxpose.xlu0.b32.cont [7/16] %v428, 128
    %575 = vxpose.xlu0.b32.cont [8/16] %v431, 128
    %576 = vxpose.xlu0.b32.cont [9/16] %v434, 128
    %577 = vxpose.xlu0.b32.cont [10/16] %v437, 128
    %578 = vxpose.xlu0.b32.cont [11/16] %v440, 128
    %579 = vxpose.xlu0.b32.cont [12/16] %v443, 128
    %580 = vxpose.xlu0.b32.cont [13/16] %v446, 128
    %581 = vxpose.xlu0.b32.cont [14/16] %v449, 128
    %582 = vxpose.xlu0.b32.cont [15/16] %v452, 128
    %583 = vxpose.xlu0.b32.end [16/16] %v455, 128
    %v584 = vpop.trf.xlu0
    %v585 = vpop.trf.xlu0
    %v586 = vpop.trf.xlu0
    %v587 = vpop.trf.xlu0
    %v588 = vpop.trf.xlu0
    %v589 = vpop.trf.xlu0
    %v590 = vpop.trf.xlu0
    %v591 = vpop.trf.xlu0
    %v592 = vpop.trf.xlu0
    %v593 = vpop.trf.xlu0
    %v594 = vpop.trf.xlu0
    %v595 = vpop.trf.xlu0
    %v596 = vpop.trf.xlu0
    %v597 = vpop.trf.xlu0
    %v598 = vpop.trf.xlu0
    %v599 = vpop.trf.xlu0
    %600 = vxpose.xlu0.b32.start [1/16] %v456, 128
    %601 = vxpose.xlu0.b32.cont [2/16] %v459, 128
    %602 = vxpose.xlu0.b32.cont [3/16] %v462, 128
    %603 = vxpose.xlu0.b32.cont [4/16] %v465, 128
    %604 = vxpose.xlu0.b32.cont [5/16] %v468, 128
    %605 = vxpose.xlu0.b32.cont [6/16] %v471, 128
    %606 = vxpose.xlu0.b32.cont [7/16] %v474, 128
    %607 = vxpose.xlu0.b32.cont [8/16] %v477, 128
    %608 = vxpose.xlu0.b32.cont [9/16] %v480, 128
    %609 = vxpose.xlu0.b32.cont [10/16] %v483, 128
    %610 = vxpose.xlu0.b32.cont [11/16] %v486, 128
    %611 = vxpose.xlu0.b32.cont [12/16] %v489, 128
    %612 = vxpose.xlu0.b32.cont [13/16] %v492, 128
    %613 = vxpose.xlu0.b32.cont [14/16] %v495, 128
    %614 = vxpose.xlu0.b32.cont [15/16] %v498, 128
    %615 = vxpose.xlu0.b32.end [16/16] %v501, 128
    %v616 = vpop.trf.xlu0
    %v617 = vpop.trf.xlu0
    %v618 = vpop.trf.xlu0
    %v619 = vpop.trf.xlu0
    %v620 = vpop.trf.xlu0
    %v621 = vpop.trf.xlu0
    %v622 = vpop.trf.xlu0
    %v623 = vpop.trf.xlu0
    %v624 = vpop.trf.xlu0
    %v625 = vpop.trf.xlu0
    %v626 = vpop.trf.xlu0
    %v627 = vpop.trf.xlu0
    %v628 = vpop.trf.xlu0
    %v629 = vpop.trf.xlu0
    %v630 = vpop.trf.xlu0
    %v631 = vpop.trf.xlu0
    %632 = vxpose.xlu0.b32.start [1/16] %v457, 128
    %633 = vxpose.xlu0.b32.cont [2/16] %v460, 128
    %634 = vxpose.xlu0.b32.cont [3/16] %v463, 128
    %635 = vxpose.xlu0.b32.cont [4/16] %v466, 128
    %636 = vxpose.xlu0.b32.cont [5/16] %v469, 128
    %637 = vxpose.xlu0.b32.cont [6/16] %v472, 128
    %638 = vxpose.xlu0.b32.cont [7/16] %v475, 128
    %639 = vxpose.xlu0.b32.cont [8/16] %v478, 128
    %640 = vxpose.xlu0.b32.cont [9/16] %v481, 128
    %641 = vxpose.xlu0.b32.cont [10/16] %v484, 128
    %642 = vxpose.xlu0.b32.cont [11/16] %v487, 128
    %643 = vxpose.xlu0.b32.cont [12/16] %v490, 128
    %644 = vxpose.xlu0.b32.cont [13/16] %v493, 128
    %645 = vxpose.xlu0.b32.cont [14/16] %v496, 128
    %646 = vxpose.xlu0.b32.cont [15/16] %v499, 128
    %647 = vxpose.xlu0.b32.end [16/16] %v502, 128
    %v648 = vpop.trf.xlu0
    %v649 = vpop.trf.xlu0
    %v650 = vpop.trf.xlu0
    %v651 = vpop.trf.xlu0
    %v652 = vpop.trf.xlu0
    %v653 = vpop.trf.xlu0
    %v654 = vpop.trf.xlu0
    %v655 = vpop.trf.xlu0
    %v656 = vpop.trf.xlu0
    %v657 = vpop.trf.xlu0
    %v658 = vpop.trf.xlu0
    %v659 = vpop.trf.xlu0
    %v660 = vpop.trf.xlu0
    %v661 = vpop.trf.xlu0
    %v662 = vpop.trf.xlu0
    %v663 = vpop.trf.xlu0
    %664 = vxpose.xlu0.b32.start [1/16] %v458, 128
    %665 = vxpose.xlu0.b32.cont [2/16] %v461, 128
    %666 = vxpose.xlu0.b32.cont [3/16] %v464, 128
    %667 = vxpose.xlu0.b32.cont [4/16] %v467, 128
    %668 = vxpose.xlu0.b32.cont [5/16] %v470, 128
    %669 = vxpose.xlu0.b32.cont [6/16] %v473, 128
    %670 = vxpose.xlu0.b32.cont [7/16] %v476, 128
    %671 = vxpose.xlu0.b32.cont [8/16] %v479, 128
    %672 = vxpose.xlu0.b32.cont [9/16] %v482, 128
    %673 = vxpose.xlu0.b32.cont [10/16] %v485, 128
    %674 = vxpose.xlu0.b32.cont [11/16] %v488, 128
    %675 = vxpose.xlu0.b32.cont [12/16] %v491, 128
    %676 = vxpose.xlu0.b32.cont [13/16] %v494, 128
    %677 = vxpose.xlu0.b32.cont [14/16] %v497, 128
    %678 = vxpose.xlu0.b32.cont [15/16] %v500, 128
    %679 = vxpose.xlu0.b32.end [16/16] %v503, 128
    %v680 = vpop.trf.xlu0
    %v681 = vpop.trf.xlu0
    %v682 = vpop.trf.xlu0
    %v683 = vpop.trf.xlu0
    %v684 = vpop.trf.xlu0
    %v685 = vpop.trf.xlu0
    %v686 = vpop.trf.xlu0
    %v687 = vpop.trf.xlu0
    %v688 = vpop.trf.xlu0
    %v689 = vpop.trf.xlu0
    %v690 = vpop.trf.xlu0
    %v691 = vpop.trf.xlu0
    %v692 = vpop.trf.xlu0
    %v693 = vpop.trf.xlu0
    %v694 = vpop.trf.xlu0
    %v695 = vpop.trf.xlu0
    %s696 = scalar_lea.vmem [#allocation5], 768
    %697 = vst [vmem:[%s696] sm:$0xff] %v520
    %698 = vst [vmem:[%s696 + $0x8] sm:$0xff] %v616
    %699 = vst [vmem:[%s696 + $0x10] sm:$0xff] %v521
    %700 = vst [vmem:[%s696 + $0x18] sm:$0xff] %v617
    %701 = vst [vmem:[%s696 + $0x20] sm:$0xff] %v522
    %702 = vst [vmem:[%s696 + $0x28] sm:$0xff] %v618
    %703 = vst [vmem:[%s696 + $0x30] sm:$0xff] %v523
    %704 = vst [vmem:[%s696 + $0x38] sm:$0xff] %v619
    %705 = vst [vmem:[%s696 + $0x40] sm:$0xff] %v524
    %706 = vst [vmem:[%s696 + $0x48] sm:$0xff] %v620
    %707 = vst [vmem:[%s696 + $0x50] sm:$0xff] %v525
    %708 = vst [vmem:[%s696 + $0x58] sm:$0xff] %v621
    %709 = vst [vmem:[%s696 + $0x60] sm:$0xff] %v526
    %710 = vst [vmem:[%s696 + $0x68] sm:$0xff] %v622
    %711 = vst [vmem:[%s696 + $0x70] sm:$0xff] %v527
    %712 = vst [vmem:[%s696 + $0x78] sm:$0xff] %v623
    %713 = vst [vmem:[%s696 + $0x80] sm:$0xff] %v528
    %714 = vst [vmem:[%s696 + $0x88] sm:$0xff] %v624
    %715 = vst [vmem:[%s696 + $0x90] sm:$0xff] %v529
    %716 = vst [vmem:[%s696 + $0x98] sm:$0xff] %v625
    %717 = vst [vmem:[%s696 + $0xa0] sm:$0xff] %v530
    %718 = vst [vmem:[%s696 + $0xa8] sm:$0xff] %v626
    %719 = vst [vmem:[%s696 + $0xb0] sm:$0xff] %v531
    %720 = vst [vmem:[%s696 + $0xb8] sm:$0xff] %v627
    %721 = vst [vmem:[%s696 + $0xc0] sm:$0xff] %v532
    %722 = vst [vmem:[%s696 + $0xc8] sm:$0xff] %v628
    %723 = vst [vmem:[%s696 + $0xd0] sm:$0xff] %v533
    %724 = vst [vmem:[%s696 + $0xd8] sm:$0xff] %v629
    %725 = vst [vmem:[%s696 + $0xe0] sm:$0xff] %v534
    %726 = vst [vmem:[%s696 + $0xe8] sm:$0xff] %v630
    %727 = vst [vmem:[%s696 + $0xf0] sm:$0xff] %v535
    %728 = vst [vmem:[%s696 + $0xf8] sm:$0xff] %v631
    %729 = vst [vmem:[%s696 + $0x100] sm:$0xff] %v552
    %730 = vst [vmem:[%s696 + $0x108] sm:$0xff] %v648
    %731 = vst [vmem:[%s696 + $0x110] sm:$0xff] %v553
    %732 = vst [vmem:[%s696 + $0x118] sm:$0xff] %v649
    %733 = vst [vmem:[%s696 + $0x120] sm:$0xff] %v554
    %734 = vst [vmem:[%s696 + $0x128] sm:$0xff] %v650
    %735 = vst [vmem:[%s696 + $0x130] sm:$0xff] %v555
    %736 = vst [vmem:[%s696 + $0x138] sm:$0xff] %v651
    %737 = vst [vmem:[%s696 + $0x140] sm:$0xff] %v556
    %738 = vst [vmem:[%s696 + $0x148] sm:$0xff] %v652
    %739 = vst [vmem:[%s696 + $0x150] sm:$0xff] %v557
    %740 = vst [vmem:[%s696 + $0x158] sm:$0xff] %v653
    %741 = vst [vmem:[%s696 + $0x160] sm:$0xff] %v558
    %742 = vst [vmem:[%s696 + $0x168] sm:$0xff] %v654
    %743 = vst [vmem:[%s696 + $0x170] sm:$0xff] %v559
    %744 = vst [vmem:[%s696 + $0x178] sm:$0xff] %v655
    %745 = vst [vmem:[%s696 + $0x180] sm:$0xff] %v560
    %746 = vst [vmem:[%s696 + $0x188] sm:$0xff] %v656
    %747 = vst [vmem:[%s696 + $0x190] sm:$0xff] %v561
    %748 = vst [vmem:[%s696 + $0x198] sm:$0xff] %v657
    %749 = vst [vmem:[%s696 + $0x1a0] sm:$0xff] %v562
    %750 = vst [vmem:[%s696 + $0x1a8] sm:$0xff] %v658
    %751 = vst [vmem:[%s696 + $0x1b0] sm:$0xff] %v563
    %752 = vst [vmem:[%s696 + $0x1b8] sm:$0xff] %v659
    %753 = vst [vmem:[%s696 + $0x1c0] sm:$0xff] %v564
    %754 = vst [vmem:[%s696 + $0x1c8] sm:$0xff] %v660
    %755 = vst [vmem:[%s696 + $0x1d0] sm:$0xff] %v565
    %756 = vst [vmem:[%s696 + $0x1d8] sm:$0xff] %v661
    %757 = vst [vmem:[%s696 + $0x1e0] sm:$0xff] %v566
    %758 = vst [vmem:[%s696 + $0x1e8] sm:$0xff] %v662
    %759 = vst [vmem:[%s696 + $0x1f0] sm:$0xff] %v567
    %760 = vst [vmem:[%s696 + $0x1f8] sm:$0xff] %v663
    %761 = vst [vmem:[%s696 + $0x200] sm:$0xff] %v584
    %762 = vst [vmem:[%s696 + $0x208] sm:$0xff] %v680
    %763 = vst [vmem:[%s696 + $0x210] sm:$0xff] %v585
    %764 = vst [vmem:[%s696 + $0x218] sm:$0xff] %v681
    %765 = vst [vmem:[%s696 + $0x220] sm:$0xff] %v586
    %766 = vst [vmem:[%s696 + $0x228] sm:$0xff] %v682
    %767 = vst [vmem:[%s696 + $0x230] sm:$0xff] %v587
    %768 = vst [vmem:[%s696 + $0x238] sm:$0xff] %v683
    %769 = vst [vmem:[%s696 + $0x240] sm:$0xff] %v588
    %770 = vst [vmem:[%s696 + $0x248] sm:$0xff] %v684
    %771 = vst [vmem:[%s696 + $0x250] sm:$0xff] %v589
    %772 = vst [vmem:[%s696 + $0x258] sm:$0xff] %v685
    %773 = vst [vmem:[%s696 + $0x260] sm:$0xff] %v590
    %774 = vst [vmem:[%s696 + $0x268] sm:$0xff] %v686
    %775 = vst [vmem:[%s696 + $0x270] sm:$0xff] %v591
    %776 = vst [vmem:[%s696 + $0x278] sm:$0xff] %v687
    %777 = vst [vmem:[%s696 + $0x280] sm:$0xff] %v592
    %778 = vst [vmem:[%s696 + $0x288] sm:$0xff] %v688
    %779 = vst [vmem:[%s696 + $0x290] sm:$0xff] %v593
    %780 = vst [vmem:[%s696 + $0x298] sm:$0xff] %v689
    %781 = vst [vmem:[%s696 + $0x2a0] sm:$0xff] %v594
    %782 = vst [vmem:[%s696 + $0x2a8] sm:$0xff] %v690
    %783 = vst [vmem:[%s696 + $0x2b0] sm:$0xff] %v595
    %784 = vst [vmem:[%s696 + $0x2b8] sm:$0xff] %v691
    %785 = vst [vmem:[%s696 + $0x2c0] sm:$0xff] %v596
    %786 = vst [vmem:[%s696 + $0x2c8] sm:$0xff] %v692
    %787 = vst [vmem:[%s696 + $0x2d0] sm:$0xff] %v597
    %788 = vst [vmem:[%s696 + $0x2d8] sm:$0xff] %v693
    %789 = vst [vmem:[%s696 + $0x2e0] sm:$0xff] %v598
    %790 = vst [vmem:[%s696 + $0x2e8] sm:$0xff] %v694
    %791 = vst [vmem:[%s696 + $0x2f0] sm:$0xff] %v599
    %792 = vst [vmem:[%s696 + $0x2f8] sm:$0xff] %v695
    %s793 = scalar_lea.vmem [#allocation2], 1536
    %v794 = vld [vmem:[%s793] sm:$0xff]
    %v795 = vld [vmem:[%s793 + $0x8] sm:$0xff]
    %v796 = vld [vmem:[%s793 + $0x10] sm:$0xff]
    %v797 = vld [vmem:[%s793 + $0x18] sm:$0xff]
    %v798 = vld [vmem:[%s793 + $0x20] sm:$0xff]
    %v799 = vld [vmem:[%s793 + $0x28] sm:$0xff]
    %v800 = vld [vmem:[%s793 + $0x30] sm:$0xff]
    %v801 = vld [vmem:[%s793 + $0x38] sm:$0xff]
    %v802 = vld [vmem:[%s793 + $0x40] sm:$0xff]
    %v803 = vld [vmem:[%s793 + $0x48] sm:$0xff]
    %v804 = vld [vmem:[%s793 + $0x50] sm:$0xff]
    %v805 = vld [vmem:[%s793 + $0x58] sm:$0xff]
    %v806 = vld [vmem:[%s793 + $0x60] sm:$0xff]
    %v807 = vld [vmem:[%s793 + $0x68] sm:$0xff]
    %v808 = vld [vmem:[%s793 + $0x70] sm:$0xff]
    %v809 = vld [vmem:[%s793 + $0x78] sm:$0xff]
    %v810 = vld [vmem:[%s793 + $0x80] sm:$0xff]
    %v811 = vld [vmem:[%s793 + $0x88] sm:$0xff]
    %v812 = vld [vmem:[%s793 + $0x90] sm:$0xff]
    %v813 = vld [vmem:[%s793 + $0x98] sm:$0xff]
    %v814 = vld [vmem:[%s793 + $0xa0] sm:$0xff]
    %v815 = vld [vmem:[%s793 + $0xa8] sm:$0xff]
    %v816 = vld [vmem:[%s793 + $0xb0] sm:$0xff]
    %v817 = vld [vmem:[%s793 + $0xb8] sm:$0xff]
    %v818 = vld [vmem:[%s793 + $0xc0] sm:$0xff]
    %v819 = vld [vmem:[%s793 + $0xc8] sm:$0xff]
    %v820 = vld [vmem:[%s793 + $0xd0] sm:$0xff]
    %v821 = vld [vmem:[%s793 + $0xd8] sm:$0xff]
    %v822 = vld [vmem:[%s793 + $0xe0] sm:$0xff]
    %v823 = vld [vmem:[%s793 + $0xe8] sm:$0xff]
    %v824 = vld [vmem:[%s793 + $0xf0] sm:$0xff]
    %v825 = vld [vmem:[%s793 + $0xf8] sm:$0xff]
    %v826 = vld [vmem:[%s793 + $0x100] sm:$0xff]
    %v827 = vld [vmem:[%s793 + $0x108] sm:$0xff]
    %v828 = vld [vmem:[%s793 + $0x110] sm:$0xff]
    %v829 = vld [vmem:[%s793 + $0x118] sm:$0xff]
    %v830 = vld [vmem:[%s793 + $0x120] sm:$0xff]
    %v831 = vld [vmem:[%s793 + $0x128] sm:$0xff]
    %v832 = vld [vmem:[%s793 + $0x130] sm:$0xff]
    %v833 = vld [vmem:[%s793 + $0x138] sm:$0xff]
    %v834 = vld [vmem:[%s793 + $0x140] sm:$0xff]
    %v835 = vld [vmem:[%s793 + $0x148] sm:$0xff]
    %v836 = vld [vmem:[%s793 + $0x150] sm:$0xff]
    %v837 = vld [vmem:[%s793 + $0x158] sm:$0xff]
    %v838 = vld [vmem:[%s793 + $0x160] sm:$0xff]
    %v839 = vld [vmem:[%s793 + $0x168] sm:$0xff]
    %v840 = vld [vmem:[%s793 + $0x170] sm:$0xff]
    %v841 = vld [vmem:[%s793 + $0x178] sm:$0xff]
    %v842 = vld [vmem:[%s793 + $0x180] sm:$0xff]
    %v843 = vld [vmem:[%s793 + $0x188] sm:$0xff]
    %v844 = vld [vmem:[%s793 + $0x190] sm:$0xff]
    %v845 = vld [vmem:[%s793 + $0x198] sm:$0xff]
    %v846 = vld [vmem:[%s793 + $0x1a0] sm:$0xff]
    %v847 = vld [vmem:[%s793 + $0x1a8] sm:$0xff]
    %v848 = vld [vmem:[%s793 + $0x1b0] sm:$0xff]
    %v849 = vld [vmem:[%s793 + $0x1b8] sm:$0xff]
    %v850 = vld [vmem:[%s793 + $0x1c0] sm:$0xff]
    %v851 = vld [vmem:[%s793 + $0x1c8] sm:$0xff]
    %v852 = vld [vmem:[%s793 + $0x1d0] sm:$0xff]
    %v853 = vld [vmem:[%s793 + $0x1d8] sm:$0xff]
    %v854 = vld [vmem:[%s793 + $0x1e0] sm:$0xff]
    %v855 = vld [vmem:[%s793 + $0x1e8] sm:$0xff]
    %v856 = vld [vmem:[%s793 + $0x1f0] sm:$0xff]
    %v857 = vld [vmem:[%s793 + $0x1f8] sm:$0xff]
    %v858 = vld [vmem:[%s793 + $0x200] sm:$0xff]
    %v859 = vld [vmem:[%s793 + $0x208] sm:$0xff]
    %v860 = vld [vmem:[%s793 + $0x210] sm:$0xff]
    %v861 = vld [vmem:[%s793 + $0x218] sm:$0xff]
    %v862 = vld [vmem:[%s793 + $0x220] sm:$0xff]
    %v863 = vld [vmem:[%s793 + $0x228] sm:$0xff]
    %v864 = vld [vmem:[%s793 + $0x230] sm:$0xff]
    %v865 = vld [vmem:[%s793 + $0x238] sm:$0xff]
    %v866 = vld [vmem:[%s793 + $0x240] sm:$0xff]
    %v867 = vld [vmem:[%s793 + $0x248] sm:$0xff]
    %v868 = vld [vmem:[%s793 + $0x250] sm:$0xff]
    %v869 = vld [vmem:[%s793 + $0x258] sm:$0xff]
    %v870 = vld [vmem:[%s793 + $0x260] sm:$0xff]
    %v871 = vld [vmem:[%s793 + $0x268] sm:$0xff]
    %v872 = vld [vmem:[%s793 + $0x270] sm:$0xff]
    %v873 = vld [vmem:[%s793 + $0x278] sm:$0xff]
    %v874 = vld [vmem:[%s793 + $0x280] sm:$0xff]
    %v875 = vld [vmem:[%s793 + $0x288] sm:$0xff]
    %v876 = vld [vmem:[%s793 + $0x290] sm:$0xff]
    %v877 = vld [vmem:[%s793 + $0x298] sm:$0xff]
    %v878 = vld [vmem:[%s793 + $0x2a0] sm:$0xff]
    %v879 = vld [vmem:[%s793 + $0x2a8] sm:$0xff]
    %v880 = vld [vmem:[%s793 + $0x2b0] sm:$0xff]
    %v881 = vld [vmem:[%s793 + $0x2b8] sm:$0xff]
    %v882 = vld [vmem:[%s793 + $0x2c0] sm:$0xff]
    %v883 = vld [vmem:[%s793 + $0x2c8] sm:$0xff]
    %v884 = vld [vmem:[%s793 + $0x2d0] sm:$0xff]
    %v885 = vld [vmem:[%s793 + $0x2d8] sm:$0xff]
    %v886 = vld [vmem:[%s793 + $0x2e0] sm:$0xff]
    %v887 = vld [vmem:[%s793 + $0x2e8] sm:$0xff]
    %v888 = vld [vmem:[%s793 + $0x2f0] sm:$0xff]
    %v889 = vld [vmem:[%s793 + $0x2f8] sm:$0xff]
    %890 = vxpose.xlu0.b32.start [1/16] %v794, 128
    %891 = vxpose.xlu0.b32.cont [2/16] %v797, 128
    %892 = vxpose.xlu0.b32.cont [3/16] %v800, 128
    %893 = vxpose.xlu0.b32.cont [4/16] %v803, 128
    %894 = vxpose.xlu0.b32.cont [5/16] %v806, 128
    %895 = vxpose.xlu0.b32.cont [6/16] %v809, 128
    %896 = vxpose.xlu0.b32.cont [7/16] %v812, 128
    %897 = vxpose.xlu0.b32.cont [8/16] %v815, 128
    %898 = vxpose.xlu0.b32.cont [9/16] %v818, 128
    %899 = vxpose.xlu0.b32.cont [10/16] %v821, 128
    %900 = vxpose.xlu0.b32.cont [11/16] %v824, 128
    %901 = vxpose.xlu0.b32.cont [12/16] %v827, 128
    %902 = vxpose.xlu0.b32.cont [13/16] %v830, 128
    %903 = vxpose.xlu0.b32.cont [14/16] %v833, 128
    %904 = vxpose.xlu0.b32.cont [15/16] %v836, 128
    %905 = vxpose.xlu0.b32.end [16/16] %v839, 128
    %v906 = vpop.trf.xlu0
    %v907 = vpop.trf.xlu0
    %v908 = vpop.trf.xlu0
    %v909 = vpop.trf.xlu0
    %v910 = vpop.trf.xlu0
    %v911 = vpop.trf.xlu0
    %v912 = vpop.trf.xlu0
    %v913 = vpop.trf.xlu0
    %v914 = vpop.trf.xlu0
    %v915 = vpop.trf.xlu0
    %v916 = vpop.trf.xlu0
    %v917 = vpop.trf.xlu0
    %v918 = vpop.trf.xlu0
    %v919 = vpop.trf.xlu0
    %v920 = vpop.trf.xlu0
    %v921 = vpop.trf.xlu0
    %922 = vxpose.xlu0.b32.start [1/16] %v795, 128
    %923 = vxpose.xlu0.b32.cont [2/16] %v798, 128
    %924 = vxpose.xlu0.b32.cont [3/16] %v801, 128
    %925 = vxpose.xlu0.b32.cont [4/16] %v804, 128
    %926 = vxpose.xlu0.b32.cont [5/16] %v807, 128
    %927 = vxpose.xlu0.b32.cont [6/16] %v810, 128
    %928 = vxpose.xlu0.b32.cont [7/16] %v813, 128
    %929 = vxpose.xlu0.b32.cont [8/16] %v816, 128
    %930 = vxpose.xlu0.b32.cont [9/16] %v819, 128
    %931 = vxpose.xlu0.b32.cont [10/16] %v822, 128
    %932 = vxpose.xlu0.b32.cont [11/16] %v825, 128
    %933 = vxpose.xlu0.b32.cont [12/16] %v828, 128
    %934 = vxpose.xlu0.b32.cont [13/16] %v831, 128
    %935 = vxpose.xlu0.b32.cont [14/16] %v834, 128
    %936 = vxpose.xlu0.b32.cont [15/16] %v837, 128
    %937 = vxpose.xlu0.b32.end [16/16] %v840, 128
    %v938 = vpop.trf.xlu0
    %v939 = vpop.trf.xlu0
    %v940 = vpop.trf.xlu0
    %v941 = vpop.trf.xlu0
    %v942 = vpop.trf.xlu0
    %v943 = vpop.trf.xlu0
    %v944 = vpop.trf.xlu0
    %v945 = vpop.trf.xlu0
    %v946 = vpop.trf.xlu0
    %v947 = vpop.trf.xlu0
    %v948 = vpop.trf.xlu0
    %v949 = vpop.trf.xlu0
    %v950 = vpop.trf.xlu0
    %v951 = vpop.trf.xlu0
    %v952 = vpop.trf.xlu0
    %v953 = vpop.trf.xlu0
    %954 = vxpose.xlu0.b32.start [1/16] %v796, 128
    %955 = vxpose.xlu0.b32.cont [2/16] %v799, 128
    %956 = vxpose.xlu0.b32.cont [3/16] %v802, 128
    %957 = vxpose.xlu0.b32.cont [4/16] %v805, 128
    %958 = vxpose.xlu0.b32.cont [5/16] %v808, 128
    %959 = vxpose.xlu0.b32.cont [6/16] %v811, 128
    %960 = vxpose.xlu0.b32.cont [7/16] %v814, 128
    %961 = vxpose.xlu0.b32.cont [8/16] %v817, 128
    %962 = vxpose.xlu0.b32.cont [9/16] %v820, 128
    %963 = vxpose.xlu0.b32.cont [10/16] %v823, 128
    %964 = vxpose.xlu0.b32.cont [11/16] %v826, 128
    %965 = vxpose.xlu0.b32.cont [12/16] %v829, 128
    %966 = vxpose.xlu0.b32.cont [13/16] %v832, 128
    %967 = vxpose.xlu0.b32.cont [14/16] %v835, 128
    %968 = vxpose.xlu0.b32.cont [15/16] %v838, 128
    %969 = vxpose.xlu0.b32.end [16/16] %v841, 128
    %v970 = vpop.trf.xlu0
    %v971 = vpop.trf.xlu0
    %v972 = vpop.trf.xlu0
    %v973 = vpop.trf.xlu0
    %v974 = vpop.trf.xlu0
    %v975 = vpop.trf.xlu0
    %v976 = vpop.trf.xlu0
    %v977 = vpop.trf.xlu0
    %v978 = vpop.trf.xlu0
    %v979 = vpop.trf.xlu0
    %v980 = vpop.trf.xlu0
    %v981 = vpop.trf.xlu0
    %v982 = vpop.trf.xlu0
    %v983 = vpop.trf.xlu0
    %v984 = vpop.trf.xlu0
    %v985 = vpop.trf.xlu0
    %986 = vxpose.xlu0.b32.start [1/16] %v842, 128
    %987 = vxpose.xlu0.b32.cont [2/16] %v845, 128
    %988 = vxpose.xlu0.b32.cont [3/16] %v848, 128
    %989 = vxpose.xlu0.b32.cont [4/16] %v851, 128
    %990 = vxpose.xlu0.b32.cont [5/16] %v854, 128
    %991 = vxpose.xlu0.b32.cont [6/16] %v857, 128
    %992 = vxpose.xlu0.b32.cont [7/16] %v860, 128
    %993 = vxpose.xlu0.b32.cont [8/16] %v863, 128
    %994 = vxpose.xlu0.b32.cont [9/16] %v866, 128
    %995 = vxpose.xlu0.b32.cont [10/16] %v869, 128
    %996 = vxpose.xlu0.b32.cont [11/16] %v872, 128
    %997 = vxpose.xlu0.b32.cont [12/16] %v875, 128
    %998 = vxpose.xlu0.b32.cont [13/16] %v878, 128
    %999 = vxpose.xlu0.b32.cont [14/16] %v881, 128
    %1000 = vxpose.xlu0.b32.cont [15/16] %v884, 128
    %1001 = vxpose.xlu0.b32.end [16/16] %v887, 128
    %v1002 = vpop.trf.xlu0
    %v1003 = vpop.trf.xlu0
    %v1004 = vpop.trf.xlu0
    %v1005 = vpop.trf.xlu0
    %v1006 = vpop.trf.xlu0
    %v1007 = vpop.trf.xlu0
    %v1008 = vpop.trf.xlu0
    %v1009 = vpop.trf.xlu0
    %v1010 = vpop.trf.xlu0
    %v1011 = vpop.trf.xlu0
    %v1012 = vpop.trf.xlu0
    %v1013 = vpop.trf.xlu0
    %v1014 = vpop.trf.xlu0
    %v1015 = vpop.trf.xlu0
    %v1016 = vpop.trf.xlu0
    %v1017 = vpop.trf.xlu0
    %1018 = vxpose.xlu0.b32.start [1/16] %v843, 128
    %1019 = vxpose.xlu0.b32.cont [2/16] %v846, 128
    %1020 = vxpose.xlu0.b32.cont [3/16] %v849, 128
    %1021 = vxpose.xlu0.b32.cont [4/16] %v852, 128
    %1022 = vxpose.xlu0.b32.cont [5/16] %v855, 128
    %1023 = vxpose.xlu0.b32.cont [6/16] %v858, 128
    %1024 = vxpose.xlu0.b32.cont [7/16] %v861, 128
    %1025 = vxpose.xlu0.b32.cont [8/16] %v864, 128
    %1026 = vxpose.xlu0.b32.cont [9/16] %v867, 128
    %1027 = vxpose.xlu0.b32.cont [10/16] %v870, 128
    %1028 = vxpose.xlu0.b32.cont [11/16] %v873, 128
    %1029 = vxpose.xlu0.b32.cont [12/16] %v876, 128
    %1030 = vxpose.xlu0.b32.cont [13/16] %v879, 128
    %1031 = vxpose.xlu0.b32.cont [14/16] %v882, 128
    %1032 = vxpose.xlu0.b32.cont [15/16] %v885, 128
    %1033 = vxpose.xlu0.b32.end [16/16] %v888, 128
    %v1034 = vpop.trf.xlu0
    %v1035 = vpop.trf.xlu0
    %v1036 = vpop.trf.xlu0
    %v1037 = vpop.trf.xlu0
    %v1038 = vpop.trf.xlu0
    %v1039 = vpop.trf.xlu0
    %v1040 = vpop.trf.xlu0
    %v1041 = vpop.trf.xlu0
    %v1042 = vpop.trf.xlu0
    %v1043 = vpop.trf.xlu0
    %v1044 = vpop.trf.xlu0
    %v1045 = vpop.trf.xlu0
    %v1046 = vpop.trf.xlu0
    %v1047 = vpop.trf.xlu0
    %v1048 = vpop.trf.xlu0
    %v1049 = vpop.trf.xlu0
    %1050 = vxpose.xlu0.b32.start [1/16] %v844, 128
    %1051 = vxpose.xlu0.b32.cont [2/16] %v847, 128
    %1052 = vxpose.xlu0.b32.cont [3/16] %v850, 128
    %1053 = vxpose.xlu0.b32.cont [4/16] %v853, 128
    %1054 = vxpose.xlu0.b32.cont [5/16] %v856, 128
    %1055 = vxpose.xlu0.b32.cont [6/16] %v859, 128
    %1056 = vxpose.xlu0.b32.cont [7/16] %v862, 128
    %1057 = vxpose.xlu0.b32.cont [8/16] %v865, 128
    %1058 = vxpose.xlu0.b32.cont [9/16] %v868, 128
    %1059 = vxpose.xlu0.b32.cont [10/16] %v871, 128
    %1060 = vxpose.xlu0.b32.cont [11/16] %v874, 128
    %1061 = vxpose.xlu0.b32.cont [12/16] %v877, 128
    %1062 = vxpose.xlu0.b32.cont [13/16] %v880, 128
    %1063 = vxpose.xlu0.b32.cont [14/16] %v883, 128
    %1064 = vxpose.xlu0.b32.cont [15/16] %v886, 128
    %1065 = vxpose.xlu0.b32.end [16/16] %v889, 128
    %v1066 = vpop.trf.xlu0
    %v1067 = vpop.trf.xlu0
    %v1068 = vpop.trf.xlu0
    %v1069 = vpop.trf.xlu0
    %v1070 = vpop.trf.xlu0
    %v1071 = vpop.trf.xlu0
    %v1072 = vpop.trf.xlu0
    %v1073 = vpop.trf.xlu0
    %v1074 = vpop.trf.xlu0
    %v1075 = vpop.trf.xlu0
    %v1076 = vpop.trf.xlu0
    %v1077 = vpop.trf.xlu0
    %v1078 = vpop.trf.xlu0
    %v1079 = vpop.trf.xlu0
    %v1080 = vpop.trf.xlu0
    %v1081 = vpop.trf.xlu0
    %s1082 = scalar_lea.vmem [#allocation5], 1536
    %1083 = vst [vmem:[%s1082] sm:$0xff] %v906
    %1084 = vst [vmem:[%s1082 + $0x8] sm:$0xff] %v1002
    %1085 = vst [vmem:[%s1082 + $0x10] sm:$0xff] %v907
    %1086 = vst [vmem:[%s1082 + $0x18] sm:$0xff] %v1003
    %1087 = vst [vmem:[%s1082 + $0x20] sm:$0xff] %v908
    %1088 = vst [vmem:[%s1082 + $0x28] sm:$0xff] %v1004
    %1089 = vst [vmem:[%s1082 + $0x30] sm:$0xff] %v909
    %1090 = vst [vmem:[%s1082 + $0x38] sm:$0xff] %v1005
    %1091 = vst [vmem:[%s1082 + $0x40] sm:$0xff] %v910
    %1092 = vst [vmem:[%s1082 + $0x48] sm:$0xff] %v1006
    %1093 = vst [vmem:[%s1082 + $0x50] sm:$0xff] %v911
    %1094 = vst [vmem:[%s1082 + $0x58] sm:$0xff] %v1007
    %1095 = vst [vmem:[%s1082 + $0x60] sm:$0xff] %v912
    %1096 = vst [vmem:[%s1082 + $0x68] sm:$0xff] %v1008
    %1097 = vst [vmem:[%s1082 + $0x70] sm:$0xff] %v913
    %1098 = vst [vmem:[%s1082 + $0x78] sm:$0xff] %v1009
    %1099 = vst [vmem:[%s1082 + $0x80] sm:$0xff] %v914
    %1100 = vst [vmem:[%s1082 + $0x88] sm:$0xff] %v1010
    %1101 = vst [vmem:[%s1082 + $0x90] sm:$0xff] %v915
    %1102 = vst [vmem:[%s1082 + $0x98] sm:$0xff] %v1011
    %1103 = vst [vmem:[%s1082 + $0xa0] sm:$0xff] %v916
    %1104 = vst [vmem:[%s1082 + $0xa8] sm:$0xff] %v1012
    %1105 = vst [vmem:[%s1082 + $0xb0] sm:$0xff] %v917
    %1106 = vst [vmem:[%s1082 + $0xb8] sm:$0xff] %v1013
    %1107 = vst [vmem:[%s1082 + $0xc0] sm:$0xff] %v918
    %1108 = vst [vmem:[%s1082 + $0xc8] sm:$0xff] %v1014
    %1109 = vst [vmem:[%s1082 + $0xd0] sm:$0xff] %v919
    %1110 = vst [vmem:[%s1082 + $0xd8] sm:$0xff] %v1015
    %1111 = vst [vmem:[%s1082 + $0xe0] sm:$0xff] %v920
    %1112 = vst [vmem:[%s1082 + $0xe8] sm:$0xff] %v1016
    %1113 = vst [vmem:[%s1082 + $0xf0] sm:$0xff] %v921
    %1114 = vst [vmem:[%s1082 + $0xf8] sm:$0xff] %v1017
    %1115 = vst [vmem:[%s1082 + $0x100] sm:$0xff] %v938
    %1116 = vst [vmem:[%s1082 + $0x108] sm:$0xff] %v1034
    %1117 = vst [vmem:[%s1082 + $0x110] sm:$0xff] %v939
    %1118 = vst [vmem:[%s1082 + $0x118] sm:$0xff] %v1035
    %1119 = vst [vmem:[%s1082 + $0x120] sm:$0xff] %v940
    %1120 = vst [vmem:[%s1082 + $0x128] sm:$0xff] %v1036
    %1121 = vst [vmem:[%s1082 + $0x130] sm:$0xff] %v941
    %1122 = vst [vmem:[%s1082 + $0x138] sm:$0xff] %v1037
    %1123 = vst [vmem:[%s1082 + $0x140] sm:$0xff] %v942
    %1124 = vst [vmem:[%s1082 + $0x148] sm:$0xff] %v1038
    %1125 = vst [vmem:[%s1082 + $0x150] sm:$0xff] %v943
    %1126 = vst [vmem:[%s1082 + $0x158] sm:$0xff] %v1039
    %1127 = vst [vmem:[%s1082 + $0x160] sm:$0xff] %v944
    %1128 = vst [vmem:[%s1082 + $0x168] sm:$0xff] %v1040
    %1129 = vst [vmem:[%s1082 + $0x170] sm:$0xff] %v945
    %1130 = vst [vmem:[%s1082 + $0x178] sm:$0xff] %v1041
    %1131 = vst [vmem:[%s1082 + $0x180] sm:$0xff] %v946
    %1132 = vst [vmem:[%s1082 + $0x188] sm:$0xff] %v1042
    %1133 = vst [vmem:[%s1082 + $0x190] sm:$0xff] %v947
    %1134 = vst [vmem:[%s1082 + $0x198] sm:$0xff] %v1043
    %1135 = vst [vmem:[%s1082 + $0x1a0] sm:$0xff] %v948
    %1136 = vst [vmem:[%s1082 + $0x1a8] sm:$0xff] %v1044
    %1137 = vst [vmem:[%s1082 + $0x1b0] sm:$0xff] %v949
    %1138 = vst [vmem:[%s1082 + $0x1b8] sm:$0xff] %v1045
    %1139 = vst [vmem:[%s1082 + $0x1c0] sm:$0xff] %v950
    %1140 = vst [vmem:[%s1082 + $0x1c8] sm:$0xff] %v1046
    %1141 = vst [vmem:[%s1082 + $0x1d0] sm:$0xff] %v951
    %1142 = vst [vmem:[%s1082 + $0x1d8] sm:$0xff] %v1047
    %1143 = vst [vmem:[%s1082 + $0x1e0] sm:$0xff] %v952
    %1144 = vst [vmem:[%s1082 + $0x1e8] sm:$0xff] %v1048
    %1145 = vst [vmem:[%s1082 + $0x1f0] sm:$0xff] %v953
    %1146 = vst [vmem:[%s1082 + $0x1f8] sm:$0xff] %v1049
    %1147 = vst [vmem:[%s1082 + $0x200] sm:$0xff] %v970
    %1148 = vst [vmem:[%s1082 + $0x208] sm:$0xff] %v1066
    %1149 = vst [vmem:[%s1082 + $0x210] sm:$0xff] %v971
    %1150 = vst [vmem:[%s1082 + $0x218] sm:$0xff] %v1067
    %1151 = vst [vmem:[%s1082 + $0x220] sm:$0xff] %v972
    %1152 = vst [vmem:[%s1082 + $0x228] sm:$0xff] %v1068
    %1153 = vst [vmem:[%s1082 + $0x230] sm:$0xff] %v973
    %1154 = vst [vmem:[%s1082 + $0x238] sm:$0xff] %v1069
    %1155 = vst [vmem:[%s1082 + $0x240] sm:$0xff] %v974
    %1156 = vst [vmem:[%s1082 + $0x248] sm:$0xff] %v1070
    %1157 = vst [vmem:[%s1082 + $0x250] sm:$0xff] %v975
    %1158 = vst [vmem:[%s1082 + $0x258] sm:$0xff] %v1071
    %1159 = vst [vmem:[%s1082 + $0x260] sm:$0xff] %v976
    %1160 = vst [vmem:[%s1082 + $0x268] sm:$0xff] %v1072
    %1161 = vst [vmem:[%s1082 + $0x270] sm:$0xff] %v977
    %1162 = vst [vmem:[%s1082 + $0x278] sm:$0xff] %v1073
    %1163 = vst [vmem:[%s1082 + $0x280] sm:$0xff] %v978
    %1164 = vst [vmem:[%s1082 + $0x288] sm:$0xff] %v1074
    %1165 = vst [vmem:[%s1082 + $0x290] sm:$0xff] %v979
    %1166 = vst [vmem:[%s1082 + $0x298] sm:$0xff] %v1075
    %1167 = vst [vmem:[%s1082 + $0x2a0] sm:$0xff] %v980
    %1168 = vst [vmem:[%s1082 + $0x2a8] sm:$0xff] %v1076
    %1169 = vst [vmem:[%s1082 + $0x2b0] sm:$0xff] %v981
    %1170 = vst [vmem:[%s1082 + $0x2b8] sm:$0xff] %v1077
    %1171 = vst [vmem:[%s1082 + $0x2c0] sm:$0xff] %v982
    %1172 = vst [vmem:[%s1082 + $0x2c8] sm:$0xff] %v1078
    %1173 = vst [vmem:[%s1082 + $0x2d0] sm:$0xff] %v983
    %1174 = vst [vmem:[%s1082 + $0x2d8] sm:$0xff] %v1079
    %1175 = vst [vmem:[%s1082 + $0x2e0] sm:$0xff] %v984
    %1176 = vst [vmem:[%s1082 + $0x2e8] sm:$0xff] %v1080
    %1177 = vst [vmem:[%s1082 + $0x2f0] sm:$0xff] %v985
    %1178 = vst [vmem:[%s1082 + $0x2f8] sm:$0xff] %v1081
    %s1179 = scalar_lea.vmem [#allocation2], 2304
    %v1180 = vld [vmem:[%s1179] sm:$0xff]
    %v1181 = vld [vmem:[%s1179 + $0x8] sm:$0xff]
    %v1182 = vld [vmem:[%s1179 + $0x10] sm:$0xff]
    %v1183 = vld [vmem:[%s1179 + $0x18] sm:$0xff]
    %v1184 = vld [vmem:[%s1179 + $0x20] sm:$0xff]
    %v1185 = vld [vmem:[%s1179 + $0x28] sm:$0xff]
    %v1186 = vld [vmem:[%s1179 + $0x30] sm:$0xff]
    %v1187 = vld [vmem:[%s1179 + $0x38] sm:$0xff]
    %v1188 = vld [vmem:[%s1179 + $0x40] sm:$0xff]
    %v1189 = vld [vmem:[%s1179 + $0x48] sm:$0xff]
    %v1190 = vld [vmem:[%s1179 + $0x50] sm:$0xff]
    %v1191 = vld [vmem:[%s1179 + $0x58] sm:$0xff]
    %v1192 = vld [vmem:[%s1179 + $0x60] sm:$0xff]
    %v1193 = vld [vmem:[%s1179 + $0x68] sm:$0xff]
    %v1194 = vld [vmem:[%s1179 + $0x70] sm:$0xff]
    %v1195 = vld [vmem:[%s1179 + $0x78] sm:$0xff]
    %v1196 = vld [vmem:[%s1179 + $0x80] sm:$0xff]
    %v1197 = vld [vmem:[%s1179 + $0x88] sm:$0xff]
    %v1198 = vld [vmem:[%s1179 + $0x90] sm:$0xff]
    %v1199 = vld [vmem:[%s1179 + $0x98] sm:$0xff]
    %v1200 = vld [vmem:[%s1179 + $0xa0] sm:$0xff]
    %v1201 = vld [vmem:[%s1179 + $0xa8] sm:$0xff]
    %v1202 = vld [vmem:[%s1179 + $0xb0] sm:$0xff]
    %v1203 = vld [vmem:[%s1179 + $0xb8] sm:$0xff]
    %v1204 = vld [vmem:[%s1179 + $0xc0] sm:$0xff]
    %v1205 = vld [vmem:[%s1179 + $0xc8] sm:$0xff]
    %v1206 = vld [vmem:[%s1179 + $0xd0] sm:$0xff]
    %v1207 = vld [vmem:[%s1179 + $0xd8] sm:$0xff]
    %v1208 = vld [vmem:[%s1179 + $0xe0] sm:$0xff]
    %v1209 = vld [vmem:[%s1179 + $0xe8] sm:$0xff]
    %v1210 = vld [vmem:[%s1179 + $0xf0] sm:$0xff]
    %v1211 = vld [vmem:[%s1179 + $0xf8] sm:$0xff]
    %v1212 = vld [vmem:[%s1179 + $0x100] sm:$0xff]
    %v1213 = vld [vmem:[%s1179 + $0x108] sm:$0xff]
    %v1214 = vld [vmem:[%s1179 + $0x110] sm:$0xff]
    %v1215 = vld [vmem:[%s1179 + $0x118] sm:$0xff]
    %v1216 = vld [vmem:[%s1179 + $0x120] sm:$0xff]
    %v1217 = vld [vmem:[%s1179 + $0x128] sm:$0xff]
    %v1218 = vld [vmem:[%s1179 + $0x130] sm:$0xff]
    %v1219 = vld [vmem:[%s1179 + $0x138] sm:$0xff]
    %v1220 = vld [vmem:[%s1179 + $0x140] sm:$0xff]
    %v1221 = vld [vmem:[%s1179 + $0x148] sm:$0xff]
    %v1222 = vld [vmem:[%s1179 + $0x150] sm:$0xff]
    %v1223 = vld [vmem:[%s1179 + $0x158] sm:$0xff]
    %v1224 = vld [vmem:[%s1179 + $0x160] sm:$0xff]
    %v1225 = vld [vmem:[%s1179 + $0x168] sm:$0xff]
    %v1226 = vld [vmem:[%s1179 + $0x170] sm:$0xff]
    %v1227 = vld [vmem:[%s1179 + $0x178] sm:$0xff]
    %v1228 = vld [vmem:[%s1179 + $0x180] sm:$0xff]
    %v1229 = vld [vmem:[%s1179 + $0x188] sm:$0xff]
    %v1230 = vld [vmem:[%s1179 + $0x190] sm:$0xff]
    %v1231 = vld [vmem:[%s1179 + $0x198] sm:$0xff]
    %v1232 = vld [vmem:[%s1179 + $0x1a0] sm:$0xff]
    %v1233 = vld [vmem:[%s1179 + $0x1a8] sm:$0xff]
    %v1234 = vld [vmem:[%s1179 + $0x1b0] sm:$0xff]
    %v1235 = vld [vmem:[%s1179 + $0x1b8] sm:$0xff]
    %v1236 = vld [vmem:[%s1179 + $0x1c0] sm:$0xff]
    %v1237 = vld [vmem:[%s1179 + $0x1c8] sm:$0xff]
    %v1238 = vld [vmem:[%s1179 + $0x1d0] sm:$0xff]
    %v1239 = vld [vmem:[%s1179 + $0x1d8] sm:$0xff]
    %v1240 = vld [vmem:[%s1179 + $0x1e0] sm:$0xff]
    %v1241 = vld [vmem:[%s1179 + $0x1e8] sm:$0xff]
    %v1242 = vld [vmem:[%s1179 + $0x1f0] sm:$0xff]
    %v1243 = vld [vmem:[%s1179 + $0x1f8] sm:$0xff]
    %v1244 = vld [vmem:[%s1179 + $0x200] sm:$0xff]
    %v1245 = vld [vmem:[%s1179 + $0x208] sm:$0xff]
    %v1246 = vld [vmem:[%s1179 + $0x210] sm:$0xff]
    %v1247 = vld [vmem:[%s1179 + $0x218] sm:$0xff]
    %v1248 = vld [vmem:[%s1179 + $0x220] sm:$0xff]
    %v1249 = vld [vmem:[%s1179 + $0x228] sm:$0xff]
    %v1250 = vld [vmem:[%s1179 + $0x230] sm:$0xff]
    %v1251 = vld [vmem:[%s1179 + $0x238] sm:$0xff]
    %v1252 = vld [vmem:[%s1179 + $0x240] sm:$0xff]
    %v1253 = vld [vmem:[%s1179 + $0x248] sm:$0xff]
    %v1254 = vld [vmem:[%s1179 + $0x250] sm:$0xff]
    %v1255 = vld [vmem:[%s1179 + $0x258] sm:$0xff]
    %v1256 = vld [vmem:[%s1179 + $0x260] sm:$0xff]
    %v1257 = vld [vmem:[%s1179 + $0x268] sm:$0xff]
    %v1258 = vld [vmem:[%s1179 + $0x270] sm:$0xff]
    %v1259 = vld [vmem:[%s1179 + $0x278] sm:$0xff]
    %v1260 = vld [vmem:[%s1179 + $0x280] sm:$0xff]
    %v1261 = vld [vmem:[%s1179 + $0x288] sm:$0xff]
    %v1262 = vld [vmem:[%s1179 + $0x290] sm:$0xff]
    %v1263 = vld [vmem:[%s1179 + $0x298] sm:$0xff]
    %v1264 = vld [vmem:[%s1179 + $0x2a0] sm:$0xff]
    %v1265 = vld [vmem:[%s1179 + $0x2a8] sm:$0xff]
    %v1266 = vld [vmem:[%s1179 + $0x2b0] sm:$0xff]
    %v1267 = vld [vmem:[%s1179 + $0x2b8] sm:$0xff]
    %v1268 = vld [vmem:[%s1179 + $0x2c0] sm:$0xff]
    %v1269 = vld [vmem:[%s1179 + $0x2c8] sm:$0xff]
    %v1270 = vld [vmem:[%s1179 + $0x2d0] sm:$0xff]
    %v1271 = vld [vmem:[%s1179 + $0x2d8] sm:$0xff]
    %v1272 = vld [vmem:[%s1179 + $0x2e0] sm:$0xff]
    %v1273 = vld [vmem:[%s1179 + $0x2e8] sm:$0xff]
    %v1274 = vld [vmem:[%s1179 + $0x2f0] sm:$0xff]
    %v1275 = vld [vmem:[%s1179 + $0x2f8] sm:$0xff]
    %1276 = vxpose.xlu0.b32.start [1/16] %v1180, 128
    %1277 = vxpose.xlu0.b32.cont [2/16] %v1183, 128
    %1278 = vxpose.xlu0.b32.cont [3/16] %v1186, 128
    %1279 = vxpose.xlu0.b32.cont [4/16] %v1189, 128
    %1280 = vxpose.xlu0.b32.cont [5/16] %v1192, 128
    %1281 = vxpose.xlu0.b32.cont [6/16] %v1195, 128
    %1282 = vxpose.xlu0.b32.cont [7/16] %v1198, 128
    %1283 = vxpose.xlu0.b32.cont [8/16] %v1201, 128
    %1284 = vxpose.xlu0.b32.cont [9/16] %v1204, 128
    %1285 = vxpose.xlu0.b32.cont [10/16] %v1207, 128
    %1286 = vxpose.xlu0.b32.cont [11/16] %v1210, 128
    %1287 = vxpose.xlu0.b32.cont [12/16] %v1213, 128
    %1288 = vxpose.xlu0.b32.cont [13/16] %v1216, 128
    %1289 = vxpose.xlu0.b32.cont [14/16] %v1219, 128
    %1290 = vxpose.xlu0.b32.cont [15/16] %v1222, 128
    %1291 = vxpose.xlu0.b32.end [16/16] %v1225, 128
    %v1292 = vpop.trf.xlu0
    %v1293 = vpop.trf.xlu0
    %v1294 = vpop.trf.xlu0
    %v1295 = vpop.trf.xlu0
    %v1296 = vpop.trf.xlu0
    %v1297 = vpop.trf.xlu0
    %v1298 = vpop.trf.xlu0
    %v1299 = vpop.trf.xlu0
    %v1300 = vpop.trf.xlu0
    %v1301 = vpop.trf.xlu0
    %v1302 = vpop.trf.xlu0
    %v1303 = vpop.trf.xlu0
    %v1304 = vpop.trf.xlu0
    %v1305 = vpop.trf.xlu0
    %v1306 = vpop.trf.xlu0
    %v1307 = vpop.trf.xlu0
    %1308 = vxpose.xlu0.b32.start [1/16] %v1181, 128
    %1309 = vxpose.xlu0.b32.cont [2/16] %v1184, 128
    %1310 = vxpose.xlu0.b32.cont [3/16] %v1187, 128
    %1311 = vxpose.xlu0.b32.cont [4/16] %v1190, 128
    %1312 = vxpose.xlu0.b32.cont [5/16] %v1193, 128
    %1313 = vxpose.xlu0.b32.cont [6/16] %v1196, 128
    %1314 = vxpose.xlu0.b32.cont [7/16] %v1199, 128
    %1315 = vxpose.xlu0.b32.cont [8/16] %v1202, 128
    %1316 = vxpose.xlu0.b32.cont [9/16] %v1205, 128
    %1317 = vxpose.xlu0.b32.cont [10/16] %v1208, 128
    %1318 = vxpose.xlu0.b32.cont [11/16] %v1211, 128
    %1319 = vxpose.xlu0.b32.cont [12/16] %v1214, 128
    %1320 = vxpose.xlu0.b32.cont [13/16] %v1217, 128
    %1321 = vxpose.xlu0.b32.cont [14/16] %v1220, 128
    %1322 = vxpose.xlu0.b32.cont [15/16] %v1223, 128
    %1323 = vxpose.xlu0.b32.end [16/16] %v1226, 128
    %v1324 = vpop.trf.xlu0
    %v1325 = vpop.trf.xlu0
    %v1326 = vpop.trf.xlu0
    %v1327 = vpop.trf.xlu0
    %v1328 = vpop.trf.xlu0
    %v1329 = vpop.trf.xlu0
    %v1330 = vpop.trf.xlu0
    %v1331 = vpop.trf.xlu0
    %v1332 = vpop.trf.xlu0
    %v1333 = vpop.trf.xlu0
    %v1334 = vpop.trf.xlu0
    %v1335 = vpop.trf.xlu0
    %v1336 = vpop.trf.xlu0
    %v1337 = vpop.trf.xlu0
    %v1338 = vpop.trf.xlu0
    %v1339 = vpop.trf.xlu0
    %1340 = vxpose.xlu0.b32.start [1/16] %v1182, 128
    %1341 = vxpose.xlu0.b32.cont [2/16] %v1185, 128
    %1342 = vxpose.xlu0.b32.cont [3/16] %v1188, 128
    %1343 = vxpose.xlu0.b32.cont [4/16] %v1191, 128
    %1344 = vxpose.xlu0.b32.cont [5/16] %v1194, 128
    %1345 = vxpose.xlu0.b32.cont [6/16] %v1197, 128
    %1346 = vxpose.xlu0.b32.cont [7/16] %v1200, 128
    %1347 = vxpose.xlu0.b32.cont [8/16] %v1203, 128
    %1348 = vxpose.xlu0.b32.cont [9/16] %v1206, 128
    %1349 = vxpose.xlu0.b32.cont [10/16] %v1209, 128
    %1350 = vxpose.xlu0.b32.cont [11/16] %v1212, 128
    %1351 = vxpose.xlu0.b32.cont [12/16] %v1215, 128
    %1352 = vxpose.xlu0.b32.cont [13/16] %v1218, 128
    %1353 = vxpose.xlu0.b32.cont [14/16] %v1221, 128
    %1354 = vxpose.xlu0.b32.cont [15/16] %v1224, 128
    %1355 = vxpose.xlu0.b32.end [16/16] %v1227, 128
    %v1356 = vpop.trf.xlu0
    %v1357 = vpop.trf.xlu0
    %v1358 = vpop.trf.xlu0
    %v1359 = vpop.trf.xlu0
    %v1360 = vpop.trf.xlu0
    %v1361 = vpop.trf.xlu0
    %v1362 = vpop.trf.xlu0
    %v1363 = vpop.trf.xlu0
    %v1364 = vpop.trf.xlu0
    %v1365 = vpop.trf.xlu0
    %v1366 = vpop.trf.xlu0
    %v1367 = vpop.trf.xlu0
    %v1368 = vpop.trf.xlu0
    %v1369 = vpop.trf.xlu0
    %v1370 = vpop.trf.xlu0
    %v1371 = vpop.trf.xlu0
    %1372 = vxpose.xlu0.b32.start [1/16] %v1228, 128
    %1373 = vxpose.xlu0.b32.cont [2/16] %v1231, 128
    %1374 = vxpose.xlu0.b32.cont [3/16] %v1234, 128
    %1375 = vxpose.xlu0.b32.cont [4/16] %v1237, 128
    %1376 = vxpose.xlu0.b32.cont [5/16] %v1240, 128
    %1377 = vxpose.xlu0.b32.cont [6/16] %v1243, 128
    %1378 = vxpose.xlu0.b32.cont [7/16] %v1246, 128
    %1379 = vxpose.xlu0.b32.cont [8/16] %v1249, 128
    %1380 = vxpose.xlu0.b32.cont [9/16] %v1252, 128
    %1381 = vxpose.xlu0.b32.cont [10/16] %v1255, 128
    %1382 = vxpose.xlu0.b32.cont [11/16] %v1258, 128
    %1383 = vxpose.xlu0.b32.cont [12/16] %v1261, 128
    %1384 = vxpose.xlu0.b32.cont [13/16] %v1264, 128
    %1385 = vxpose.xlu0.b32.cont [14/16] %v1267, 128
    %1386 = vxpose.xlu0.b32.cont [15/16] %v1270, 128
    %1387 = vxpose.xlu0.b32.end [16/16] %v1273, 128
    %v1388 = vpop.trf.xlu0
    %v1389 = vpop.trf.xlu0
    %v1390 = vpop.trf.xlu0
    %v1391 = vpop.trf.xlu0
    %v1392 = vpop.trf.xlu0
    %v1393 = vpop.trf.xlu0
    %v1394 = vpop.trf.xlu0
    %v1395 = vpop.trf.xlu0
    %v1396 = vpop.trf.xlu0
    %v1397 = vpop.trf.xlu0
    %v1398 = vpop.trf.xlu0
    %v1399 = vpop.trf.xlu0
    %v1400 = vpop.trf.xlu0
    %v1401 = vpop.trf.xlu0
    %v1402 = vpop.trf.xlu0
    %v1403 = vpop.trf.xlu0
    %1404 = vxpose.xlu0.b32.start [1/16] %v1229, 128
    %1405 = vxpose.xlu0.b32.cont [2/16] %v1232, 128
    %1406 = vxpose.xlu0.b32.cont [3/16] %v1235, 128
    %1407 = vxpose.xlu0.b32.cont [4/16] %v1238, 128
    %1408 = vxpose.xlu0.b32.cont [5/16] %v1241, 128
    %1409 = vxpose.xlu0.b32.cont [6/16] %v1244, 128
    %1410 = vxpose.xlu0.b32.cont [7/16] %v1247, 128
    %1411 = vxpose.xlu0.b32.cont [8/16] %v1250, 128
    %1412 = vxpose.xlu0.b32.cont [9/16] %v1253, 128
    %1413 = vxpose.xlu0.b32.cont [10/16] %v1256, 128
    %1414 = vxpose.xlu0.b32.cont [11/16] %v1259, 128
    %1415 = vxpose.xlu0.b32.cont [12/16] %v1262, 128
    %1416 = vxpose.xlu0.b32.cont [13/16] %v1265, 128
    %1417 = vxpose.xlu0.b32.cont [14/16] %v1268, 128
    %1418 = vxpose.xlu0.b32.cont [15/16] %v1271, 128
    %1419 = vxpose.xlu0.b32.end [16/16] %v1274, 128
    %v1420 = vpop.trf.xlu0
    %v1421 = vpop.trf.xlu0
    %v1422 = vpop.trf.xlu0
    %v1423 = vpop.trf.xlu0
    %v1424 = vpop.trf.xlu0
    %v1425 = vpop.trf.xlu0
    %v1426 = vpop.trf.xlu0
    %v1427 = vpop.trf.xlu0
    %v1428 = vpop.trf.xlu0
    %v1429 = vpop.trf.xlu0
    %v1430 = vpop.trf.xlu0
    %v1431 = vpop.trf.xlu0
    %v1432 = vpop.trf.xlu0
    %v1433 = vpop.trf.xlu0
    %v1434 = vpop.trf.xlu0
    %v1435 = vpop.trf.xlu0
    %1436 = vxpose.xlu0.b32.start [1/16] %v1230, 128
    %1437 = vxpose.xlu0.b32.cont [2/16] %v1233, 128
    %1438 = vxpose.xlu0.b32.cont [3/16] %v1236, 128
    %1439 = vxpose.xlu0.b32.cont [4/16] %v1239, 128
    %1440 = vxpose.xlu0.b32.cont [5/16] %v1242, 128
    %1441 = vxpose.xlu0.b32.cont [6/16] %v1245, 128
    %1442 = vxpose.xlu0.b32.cont [7/16] %v1248, 128
    %1443 = vxpose.xlu0.b32.cont [8/16] %v1251, 128
    %1444 = vxpose.xlu0.b32.cont [9/16] %v1254, 128
    %1445 = vxpose.xlu0.b32.cont [10/16] %v1257, 128
    %1446 = vxpose.xlu0.b32.cont [11/16] %v1260, 128
    %1447 = vxpose.xlu0.b32.cont [12/16] %v1263, 128
    %1448 = vxpose.xlu0.b32.cont [13/16] %v1266, 128
    %1449 = vxpose.xlu0.b32.cont [14/16] %v1269, 128
    %1450 = vxpose.xlu0.b32.cont [15/16] %v1272, 128
    %1451 = vxpose.xlu0.b32.end [16/16] %v1275, 128
    %v1452 = vpop.trf.xlu0
    %v1453 = vpop.trf.xlu0
    %v1454 = vpop.trf.xlu0
    %v1455 = vpop.trf.xlu0
    %v1456 = vpop.trf.xlu0
    %v1457 = vpop.trf.xlu0
    %v1458 = vpop.trf.xlu0
    %v1459 = vpop.trf.xlu0
    %v1460 = vpop.trf.xlu0
    %v1461 = vpop.trf.xlu0
    %v1462 = vpop.trf.xlu0
    %v1463 = vpop.trf.xlu0
    %v1464 = vpop.trf.xlu0
    %v1465 = vpop.trf.xlu0
    %v1466 = vpop.trf.xlu0
    %v1467 = vpop.trf.xlu0
    %s1468 = scalar_lea.vmem [#allocation5], 2304
    %1469 = vst [vmem:[%s1468] sm:$0xff] %v1292
    %1470 = vst [vmem:[%s1468 + $0x8] sm:$0xff] %v1388
    %1471 = vst [vmem:[%s1468 + $0x10] sm:$0xff] %v1293
    %1472 = vst [vmem:[%s1468 + $0x18] sm:$0xff] %v1389
    %1473 = vst [vmem:[%s1468 + $0x20] sm:$0xff] %v1294
    %1474 = vst [vmem:[%s1468 + $0x28] sm:$0xff] %v1390
    %1475 = vst [vmem:[%s1468 + $0x30] sm:$0xff] %v1295
    %1476 = vst [vmem:[%s1468 + $0x38] sm:$0xff] %v1391
    %1477 = vst [vmem:[%s1468 + $0x40] sm:$0xff] %v1296
    %1478 = vst [vmem:[%s1468 + $0x48] sm:$0xff] %v1392
    %1479 = vst [vmem:[%s1468 + $0x50] sm:$0xff] %v1297
    %1480 = vst [vmem:[%s1468 + $0x58] sm:$0xff] %v1393
    %1481 = vst [vmem:[%s1468 + $0x60] sm:$0xff] %v1298
    %1482 = vst [vmem:[%s1468 + $0x68] sm:$0xff] %v1394
    %1483 = vst [vmem:[%s1468 + $0x70] sm:$0xff] %v1299
    %1484 = vst [vmem:[%s1468 + $0x78] sm:$0xff] %v1395
    %1485 = vst [vmem:[%s1468 + $0x80] sm:$0xff] %v1300
    %1486 = vst [vmem:[%s1468 + $0x88] sm:$0xff] %v1396
    %1487 = vst [vmem:[%s1468 + $0x90] sm:$0xff] %v1301
    %1488 = vst [vmem:[%s1468 + $0x98] sm:$0xff] %v1397
    %1489 = vst [vmem:[%s1468 + $0xa0] sm:$0xff] %v1302
    %1490 = vst [vmem:[%s1468 + $0xa8] sm:$0xff] %v1398
    %1491 = vst [vmem:[%s1468 + $0xb0] sm:$0xff] %v1303
    %1492 = vst [vmem:[%s1468 + $0xb8] sm:$0xff] %v1399
    %1493 = vst [vmem:[%s1468 + $0xc0] sm:$0xff] %v1304
    %1494 = vst [vmem:[%s1468 + $0xc8] sm:$0xff] %v1400
    %1495 = vst [vmem:[%s1468 + $0xd0] sm:$0xff] %v1305
    %1496 = vst [vmem:[%s1468 + $0xd8] sm:$0xff] %v1401
    %1497 = vst [vmem:[%s1468 + $0xe0] sm:$0xff] %v1306
    %1498 = vst [vmem:[%s1468 + $0xe8] sm:$0xff] %v1402
    %1499 = vst [vmem:[%s1468 + $0xf0] sm:$0xff] %v1307
    %1500 = vst [vmem:[%s1468 + $0xf8] sm:$0xff] %v1403
    %1501 = vst [vmem:[%s1468 + $0x100] sm:$0xff] %v1324
    %1502 = vst [vmem:[%s1468 + $0x108] sm:$0xff] %v1420
    %1503 = vst [vmem:[%s1468 + $0x110] sm:$0xff] %v1325
    %1504 = vst [vmem:[%s1468 + $0x118] sm:$0xff] %v1421
    %1505 = vst [vmem:[%s1468 + $0x120] sm:$0xff] %v1326
    %1506 = vst [vmem:[%s1468 + $0x128] sm:$0xff] %v1422
    %1507 = vst [vmem:[%s1468 + $0x130] sm:$0xff] %v1327
    %1508 = vst [vmem:[%s1468 + $0x138] sm:$0xff] %v1423
    %1509 = vst [vmem:[%s1468 + $0x140] sm:$0xff] %v1328
    %1510 = vst [vmem:[%s1468 + $0x148] sm:$0xff] %v1424
    %1511 = vst [vmem:[%s1468 + $0x150] sm:$0xff] %v1329
    %1512 = vst [vmem:[%s1468 + $0x158] sm:$0xff] %v1425
    %1513 = vst [vmem:[%s1468 + $0x160] sm:$0xff] %v1330
    %1514 = vst [vmem:[%s1468 + $0x168] sm:$0xff] %v1426
    %1515 = vst [vmem:[%s1468 + $0x170] sm:$0xff] %v1331
    %1516 = vst [vmem:[%s1468 + $0x178] sm:$0xff] %v1427
    %1517 = vst [vmem:[%s1468 + $0x180] sm:$0xff] %v1332
    %1518 = vst [vmem:[%s1468 + $0x188] sm:$0xff] %v1428
    %1519 = vst [vmem:[%s1468 + $0x190] sm:$0xff] %v1333
    %1520 = vst [vmem:[%s1468 + $0x198] sm:$0xff] %v1429
    %1521 = vst [vmem:[%s1468 + $0x1a0] sm:$0xff] %v1334
    %1522 = vst [vmem:[%s1468 + $0x1a8] sm:$0xff] %v1430
    %1523 = vst [vmem:[%s1468 + $0x1b0] sm:$0xff] %v1335
    %1524 = vst [vmem:[%s1468 + $0x1b8] sm:$0xff] %v1431
    %1525 = vst [vmem:[%s1468 + $0x1c0] sm:$0xff] %v1336
    %1526 = vst [vmem:[%s1468 + $0x1c8] sm:$0xff] %v1432
    %1527 = vst [vmem:[%s1468 + $0x1d0] sm:$0xff] %v1337
    %1528 = vst [vmem:[%s1468 + $0x1d8] sm:$0xff] %v1433
    %1529 = vst [vmem:[%s1468 + $0x1e0] sm:$0xff] %v1338
    %1530 = vst [vmem:[%s1468 + $0x1e8] sm:$0xff] %v1434
    %1531 = vst [vmem:[%s1468 + $0x1f0] sm:$0xff] %v1339
    %1532 = vst [vmem:[%s1468 + $0x1f8] sm:$0xff] %v1435
    %1533 = vst [vmem:[%s1468 + $0x200] sm:$0xff] %v1356
    %1534 = vst [vmem:[%s1468 + $0x208] sm:$0xff] %v1452
    %1535 = vst [vmem:[%s1468 + $0x210] sm:$0xff] %v1357
    %1536 = vst [vmem:[%s1468 + $0x218] sm:$0xff] %v1453
    %1537 = vst [vmem:[%s1468 + $0x220] sm:$0xff] %v1358
    %1538 = vst [vmem:[%s1468 + $0x228] sm:$0xff] %v1454
    %1539 = vst [vmem:[%s1468 + $0x230] sm:$0xff] %v1359
    %1540 = vst [vmem:[%s1468 + $0x238] sm:$0xff] %v1455
    %1541 = vst [vmem:[%s1468 + $0x240] sm:$0xff] %v1360
    %1542 = vst [vmem:[%s1468 + $0x248] sm:$0xff] %v1456
    %1543 = vst [vmem:[%s1468 + $0x250] sm:$0xff] %v1361
    %1544 = vst [vmem:[%s1468 + $0x258] sm:$0xff] %v1457
    %1545 = vst [vmem:[%s1468 + $0x260] sm:$0xff] %v1362
    %1546 = vst [vmem:[%s1468 + $0x268] sm:$0xff] %v1458
    %1547 = vst [vmem:[%s1468 + $0x270] sm:$0xff] %v1363
    %1548 = vst [vmem:[%s1468 + $0x278] sm:$0xff] %v1459
    %1549 = vst [vmem:[%s1468 + $0x280] sm:$0xff] %v1364
    %1550 = vst [vmem:[%s1468 + $0x288] sm:$0xff] %v1460
    %1551 = vst [vmem:[%s1468 + $0x290] sm:$0xff] %v1365
    %1552 = vst [vmem:[%s1468 + $0x298] sm:$0xff] %v1461
    %1553 = vst [vmem:[%s1468 + $0x2a0] sm:$0xff] %v1366
    %1554 = vst [vmem:[%s1468 + $0x2a8] sm:$0xff] %v1462
    %1555 = vst [vmem:[%s1468 + $0x2b0] sm:$0xff] %v1367
    %1556 = vst [vmem:[%s1468 + $0x2b8] sm:$0xff] %v1463
    %1557 = vst [vmem:[%s1468 + $0x2c0] sm:$0xff] %v1368
    %1558 = vst [vmem:[%s1468 + $0x2c8] sm:$0xff] %v1464
    %1559 = vst [vmem:[%s1468 + $0x2d0] sm:$0xff] %v1369
    %1560 = vst [vmem:[%s1468 + $0x2d8] sm:$0xff] %v1465
    %1561 = vst [vmem:[%s1468 + $0x2e0] sm:$0xff] %v1370
    %1562 = vst [vmem:[%s1468 + $0x2e8] sm:$0xff] %v1466
    %1563 = vst [vmem:[%s1468 + $0x2f0] sm:$0xff] %v1371
    %1564 = vst [vmem:[%s1468 + $0x2f8] sm:$0xff] %v1467
    // Predicated region
    $region10: #{tpu_custom_call.1} parent=1 // pred_check
      _
    $region11: #{tpu_custom_call.1} parent=1 // pred_check_branch
      %1566 = sbr.rel (0) target = $region13
    $region12: #{tpu_custom_call.1} parent=1 // pred_region
      %s1568 = ssub.s32 49152, 49152
      %1569 = vsyncadd [#allocation4], %s1568
      %s1570 = sshll.u32 [#allocation5], 4
      %s1571 = int_to_ptr.vmem [resolvable:$true] %s1570
      %1576 = dma.vmem_to_hbm [thread:$0]  %s1571, 49152, %s1, [#allocation4], 256, 256, 16
    $region13: #{tpu_custom_call.1} parent=1 // pred_fallthru
      _
    // Predicated region
    $region14: #{tpu_custom_call.1} parent=1 // pred_check
      _
    $region15: #{tpu_custom_call.1} parent=1 // pred_check_branch
      %1578 = sbr.rel (0) target = $region17
    $region16: #{tpu_custom_call.1} parent=1 // pred_region
      %1579 = dma.done [#allocation4], 49152
    $region17: #{tpu_custom_call.1} parent=1 // pred_fallthru
      _
    %1580 = vsyncpa [#allocation3], 1
    %1581 = vsyncpa [#allocation4], 1

</llo_original>
